<compile_context>
chip_gen: v6e
topology: v6e:2x2x1
jax: 0.10.0
libtpu: 0.0.40
codegen_flags: <defaults>
</compile_context>

<pallas_src>
import functools

import jax
import jax.numpy as jnp
from jax.experimental import pallas as pl
from jax.experimental.pallas import tpu as pltpu

EPS = 1e-5
LANE = 128


def _basic_block_kernel(x_ref, m1_ref, g1_ref, b1_ref, m2_ref, g2_ref, b2_ref,
                        tn_ref, s_ref, out_ref, *, BH):
    """Fused BasicBlock forward (single program, everything VMEM-resident).

    x_ref   : (BH, WC)     f32  lane-folded NHWC input rows (also the residual)
    m*_ref  : (3*WC, WC)   bf16 stacked banded conv weights (ky = 0, 1, 2)
    g*/b*   : (1, WC)      f32  BN gamma/beta tiled across the W lane groups
    tn_ref  : (WC, WC)     f32  per-channel gather matrix, pre-scaled 1/(B*H*W)
    s_ref   : (2*BH, BH)   f32  stacked [shift-up; shift-down] 0/1 matrices
                                (vertical zero padding + image boundaries folded in)
    out_ref : (BH, WC)
    """
    x = x_ref[...].astype(jnp.float32)
    tn = tn_ref[...]
    s_cat = s_ref[...]

    def conv3x3_bn(act, m_ref, g_ref, b_ref):
        # Vertical +/-1 row shifts ride the MXU (tiny 0/1 matmul).  The result rows
        # are exact copies of neighbouring rows, or zeros at image tops/bottoms
        # (== the conv's vertical zero padding), so no halo scratch is needed.
        shifted = jnp.dot(s_cat, act, preferred_element_type=jnp.float32)   # (2BH, WC)
        # Merged-K conv: one (BH, 3*WC) x (3*WC, WC) MXU matmul per conv.
        # Single bf16 cast per conv (the concatenated LHS); accumulation stays f32.
        lhs = jnp.concatenate([shifted[:BH], act, shifted[BH:]], axis=-1)   # (BH, 3WC)
        acc = jnp.dot(lhs.astype(jnp.bfloat16), m_ref[...],
                      preferred_element_type=jnp.float32)                   # (BH, WC)

        # BatchNorm2d training-mode forward, biased stats over (N, H, W).
        # `tn` gathers per-channel sums (pre-scaled by 1/(B*H*W)) and broadcasts
        # them back over the W lane groups in one tiny matmul.  Two-pass
        # (centered) variance for numerical robustness.
        mean = jnp.dot(jnp.sum(acc, axis=0, keepdims=True), tn,
                       preferred_element_type=jnp.float32)                  # (1, WC)
        centered = acc - mean
        var = jnp.dot(jnp.sum(centered * centered, axis=0, keepdims=True), tn,
                      preferred_element_type=jnp.float32)                   # (1, WC)
        inv_std = jax.lax.rsqrt(var + EPS)
        return centered * (g_ref[...] * inv_std) + b_ref[...]

    # Stage 1: conv1 -> bn1 -> relu.  Intermediate never leaves VMEM.
    y1 = jnp.maximum(conv3x3_bn(x, m1_ref, g1_ref, b1_ref), 0.0)
    # Stage 2: conv2 -> bn2 -> + residual -> relu.
    y2 = conv3x3_bn(y1, m2_ref, g2_ref, b2_ref)
    out_ref[...] = jnp.maximum(y2 + x, 0.0).astype(out_ref.dtype)


def _stacked_band_matrices(w_hwio, width, c_pad):
    """Fold the 3 kx taps + horizontal zero-padding of a padded 3x3 conv into banded
    block-Toeplitz matrices, one per ky, stacked along axis 0.

    w_hwio : (3, 3, C, C)  ->  (3*width*c_pad, width*c_pad) bf16
    M_ky[(w + kx - 1)*c_pad + ci, w*c_pad + co] = w_hwio[ky, kx, ci, co]
    (rows outside [0, width) are omitted == horizontal zero padding; channels >= C
    are zero == lane padding to 128).
    """
    kh, kw, cin, cout = w_hwio.shape
    wp = jnp.zeros((kh, kw, c_pad, c_pad), jnp.float32)
    wp = wp.at[:, :, :cin, :cout].set(w_hwio.astype(jnp.float32))
    mats = []
    for ky in range(kh):
        m = jnp.zeros((width * c_pad, width * c_pad), jnp.float32)
        for kx in range(kw):
            shift = jnp.eye(width, width, k=-(kx - 1), dtype=jnp.float32)
            m = m + jnp.kron(shift, wp[ky, kx])
        mats.append(m)
    return jnp.concatenate(mats, axis=0).astype(jnp.bfloat16)


def _tiled_affine(v, width, c_pad):
    """Per-channel BN gamma/beta, zero-padded to c_pad and tiled across W lanes."""
    vp = jnp.zeros((c_pad,), jnp.float32).at[:v.shape[0]].set(v.astype(jnp.float32))
    return jnp.tile(vp, width).reshape(1, width * c_pad)


def _row_shift_matrices(batch, height):
    """Stacked [shift-up; shift-down] 0/1 matrices over the flattened B*H row axis.
    Zero rows at image tops/bottoms implement the conv's vertical zero padding and
    keep images from bleeding into each other."""
    n = batch * height
    r = jnp.arange(n)
    up = ((r[:, None] - 1) == r[None, :]) & ((r % height) != 0)[:, None]
    down = ((r[:, None] + 1) == r[None, :]) & ((r % height) != height - 1)[:, None]
    return jnp.concatenate([up, down], axis=0).astype(jnp.float32)        # (2n, n)


@jax.jit
def basic_block_forward(x_nchw, params):
    """BasicBlock forward.  Input/output NCHW (PyTorch); lane-folded NHWC inside."""
    B, C, H, W = x_nchw.shape
    # Pad channels so the folded lane axis W*Cp is 128-dense.
    if (W * C) % LANE != 0 and LANE % W == 0:
        Cp = max(C, LANE // W)
    else:
        Cp = C  # TODO(synk): general lane padding for widths that don't divide 128
    WC = W * Cp
    BH = B * H

    x_nhwc = jnp.transpose(x_nchw, (0, 2, 3, 1))
    x_nhwc = jnp.pad(x_nhwc, ((0, 0), (0, 0), (0, 0), (0, Cp - C)))
    x2d = x_nhwc.reshape(BH, WC)

    m1 = _stacked_band_matrices(params["w1"], W, Cp)
    m2 = _stacked_band_matrices(params["w2"], W, Cp)
    g1 = _tiled_affine(params["g1"], W, Cp)
    b1 = _tiled_affine(params["b1"], W, Cp)
    g2 = _tiled_affine(params["g2"], W, Cp)
    b2 = _tiled_affine(params["b2"], W, Cp)
    # Per-channel gather/broadcast matrix for BN stats, pre-scaled by 1/(B*H*W).
    tn = (jnp.kron(jnp.ones((W, W), jnp.float32), jnp.eye(Cp, dtype=jnp.float32))
          / float(B * H * W))
    s_cat = _row_shift_matrices(B, H)

    inputs = [x2d, m1, g1, b1, m2, g2, b2, tn, s_cat]

    def full_spec(shape):
        nd = len(shape)
        return pl.BlockSpec(shape, lambda i, _nd=nd: (0,) * _nd)

    kernel = functools.partial(_basic_block_kernel, BH=BH)

    # 2 convs x (merged-K conv matmul + row-shift matmul + 2 BN gather matmuls).
    flops = 2 * (2 * BH * (3 * WC) * WC            # main conv contraction
                 + 2 * (2 * BH) * BH * WC          # row-shift matmul
                 + 2 * 2 * WC * WC)                # BN stat gathers
    bytes_accessed = sum(int(a.size) * a.dtype.itemsize for a in inputs)
    bytes_accessed += BH * WC * x_nchw.dtype.itemsize  # output

    out2d = pl.pallas_call(
        kernel,
        out_shape=jax.ShapeDtypeStruct((BH, WC), x_nchw.dtype),
        grid=(1,),    # single program on purpose at toy shapes; see production TODO
        in_specs=[full_spec(a.shape) for a in inputs],
        out_specs=full_spec((BH, WC)),
        compiler_params=pltpu.CompilerParams(
            dimension_semantics=("arbitrary",),
            vmem_limit_bytes=32 * 1024 * 1024),
        cost_estimate=pl.CostEstimate(flops=int(flops), transcendentals=2 * WC,
                                      bytes_accessed=int(bytes_accessed)),
    )(*inputs)

    out = out2d.reshape(B, H, W, Cp)[..., :C]      # drop the zero lane-padding
    return jnp.transpose(out, (0, 3, 1, 2))


# ---------------- pure-JAX reference (for correctness check only) -----------
def _reference_forward(x_nchw, params):
    def conv(x, w_hwio):
        return jax.lax.conv_general_dilated(
            x, w_hwio, window_strides=(1, 1), padding="SAME",
            dimension_numbers=("NCHW", "HWIO", "NCHW"))

    def bn(x, g, b):
        mean = jnp.mean(x, axis=(0, 2, 3), keepdims=True)
        var = jnp.mean((x - mean) ** 2, axis=(0, 2, 3), keepdims=True)
        return ((x - mean) * jax.lax.rsqrt(var + EPS) * g.reshape(1, -1, 1, 1)
                + b.reshape(1, -1, 1, 1))

    out = jax.nn.relu(bn(conv(x_nchw, params["w1"]), params["g1"], params["b1"]))
    out = bn(conv(out, params["w2"]), params["g2"], params["b2"])
    return jax.nn.relu(out + x_nchw)


if __name__ == "__main__":
    B, C, H, W = 2, 4, 16, 16          # inplanes == planes == 4, stride == 1
    key = jax.random.PRNGKey(0)
    kx, kw1, kw2, kg1, kb1, kg2, kb2 = jax.random.split(key, 7)

    def bf16_representable(a):
        # Inputs/weights exactly representable in bf16 so the bf16-MXU kernel can be
        # compared against the f32 reference; only the VMEM-resident intermediate
        # activation y1 is additionally rounded inside the kernel.
        return a.astype(jnp.bfloat16).astype(jnp.float32)

    x = bf16_representable(jax.random.normal(kx, (B, C, H, W), jnp.float32))

    params = {
        # conv weights stored HWIO (3, 3, Cin, Cout)
        "w1": bf16_representable(
            jax.random.normal(kw1, (3, 3, C, C), jnp.float32) * 0.1),
        "w2": bf16_representable(
            jax.random.normal(kw2, (3, 3, C, C), jnp.float32) * 0.1),
        "g1": jax.random.uniform(kg1, (C,), jnp.float32, 0.5, 1.5),
        "b1": jax.random.normal(kb1, (C,), jnp.float32) * 0.1,
        "g2": jax.random.uniform(kg2, (C,), jnp.float32, 0.5, 1.5),
        "b2": jax.random.normal(kb2, (C,), jnp.float32) * 0.1,
    }

    out = jax.block_until_ready(basic_block_forward(x, params))
    ref = jax.block_until_ready(_reference_forward(x, params))

    assert out.shape == (B, C, H, W)
    max_err = float(jnp.max(jnp.abs(out - ref)))
    # Tolerance accounts for the documented bf16 rounding of the intermediate
    # activation before the second conv (accumulation stays f32).
    assert jnp.allclose(out, ref, atol=5e-2, rtol=5e-2), f"max abs err {max_err}"
    print("KERNEL_OK")
</pallas_src>

<mosaic_0001>
module attributes {stable_mosaic.version = 11 : i64} {
  func.func @_basic_block_kernel(%arg0: i32, %arg1: memref<32x128xf32, #tpu.memory_space<vmem>>, %arg2: memref<384x128xbf16, #tpu.memory_space<vmem>>, %arg3: memref<1x128xf32, #tpu.memory_space<vmem>>, %arg4: memref<1x128xf32, #tpu.memory_space<vmem>>, %arg5: memref<384x128xbf16, #tpu.memory_space<vmem>>, %arg6: memref<1x128xf32, #tpu.memory_space<vmem>>, %arg7: memref<1x128xf32, #tpu.memory_space<vmem>>, %arg8: memref<128x128xf32, #tpu.memory_space<vmem>>, %arg9: memref<64x32xf32, #tpu.memory_space<vmem>>, %arg10: memref<32x128xf32, #tpu.memory_space<vmem>>) attributes {dimension_semantics = [#tpu.dimension_semantics<arbitrary>], iteration_bounds = array<i64: 1>, scalar_prefetch = 0 : i64, scratch_operands = 0 : i64, tpu.core_type = #tpu.core_type<tc>, window_params = [{pipeline_mode = #tpu.pipeline_mode<synchronous>, transform_indices = @transform_0, window_bounds = array<i64: 32, 128>}, {pipeline_mode = #tpu.pipeline_mode<synchronous>, transform_indices = @transform_1, window_bounds = array<i64: 384, 128>}, {pipeline_mode = #tpu.pipeline_mode<synchronous>, transform_indices = @transform_2, window_bounds = array<i64: 1, 128>}, {pipeline_mode = #tpu.pipeline_mode<synchronous>, transform_indices = @transform_3, window_bounds = array<i64: 1, 128>}, {pipeline_mode = #tpu.pipeline_mode<synchronous>, transform_indices = @transform_4, window_bounds = array<i64: 384, 128>}, {pipeline_mode = #tpu.pipeline_mode<synchronous>, transform_indices = @transform_5, window_bounds = array<i64: 1, 128>}, {pipeline_mode = #tpu.pipeline_mode<synchronous>, transform_indices = @transform_6, window_bounds = array<i64: 1, 128>}, {pipeline_mode = #tpu.pipeline_mode<synchronous>, transform_indices = @transform_7, window_bounds = array<i64: 128, 128>}, {pipeline_mode = #tpu.pipeline_mode<synchronous>, transform_indices = @transform_8, window_bounds = array<i64: 64, 32>}, {pipeline_mode = #tpu.pipeline_mode<synchronous>, transform_indices = @transform_9, window_bounds = array<i64: 32, 128>}]} {
    %c0 = arith.constant 0 : index
    %c0_0 = arith.constant 0 : index
    %0 = vector.load %arg1[%c0, %c0_0] : memref<32x128xf32, #tpu.memory_space<vmem>>, vector<32x128xf32>
    %c0_1 = arith.constant 0 : index
    %c0_2 = arith.constant 0 : index
    %1 = vector.load %arg8[%c0_1, %c0_2] : memref<128x128xf32, #tpu.memory_space<vmem>>, vector<128x128xf32>
    %c0_3 = arith.constant 0 : index
    %c0_4 = arith.constant 0 : index
    %2 = vector.load %arg9[%c0_3, %c0_4] : memref<64x32xf32, #tpu.memory_space<vmem>>, vector<64x32xf32>
    %cst = arith.constant dense<0.000000e+00> : vector<64x128xf32>
    %3 = tpu.matmul %2, %0, %cst {dimension_numbers = #tpu.dot_dimension_numbers<[1], [0], [0], [1], [0, 0, 1, 1], [], []>} : vector<64x32xf32>, vector<32x128xf32>, vector<64x128xf32> -> vector<64x128xf32>
    %4 = vector.extract_strided_slice %3 {offsets = [0, 0], sizes = [32, 128], strides = [1, 1]} : vector<64x128xf32> to vector<32x128xf32>
    %5 = vector.extract_strided_slice %3 {offsets = [32, 0], sizes = [32, 128], strides = [1, 1]} : vector<64x128xf32> to vector<32x128xf32>
    %6 = tpu.concatenate %4, %0, %5 in 1 : vector<32x128xf32>, vector<32x128xf32>, vector<32x128xf32> -> vector<32x384xf32>
    %7 = arith.truncf %6 : vector<32x384xf32> to vector<32x384xbf16>
    %c0_5 = arith.constant 0 : index
    %c0_6 = arith.constant 0 : index
    %8 = vector.load %arg2[%c0_5, %c0_6] : memref<384x128xbf16, #tpu.memory_space<vmem>>, vector<384x128xbf16>
    %cst_7 = arith.constant dense<0.000000e+00> : vector<32x128xf32>
    %9 = tpu.matmul %7, %8, %cst_7 {dimension_numbers = #tpu.dot_dimension_numbers<[1], [0], [0], [1], [0, 0, 1, 1], [], []>} : vector<32x384xbf16>, vector<384x128xbf16>, vector<32x128xf32> -> vector<32x128xf32>
    %cst_8 = arith.constant dense<0.000000e+00> : vector<128xf32>
    %10 = vector.multi_reduction <add>, %9, %cst_8 [0] : vector<32x128xf32> to vector<128xf32>
    %11 = vector.shape_cast %10 : vector<128xf32> to vector<1x128xf32>
    %cst_9 = arith.constant dense<0.000000e+00> : vector<1x128xf32>
    %12 = tpu.matmul %11, %1, %cst_9 {dimension_numbers = #tpu.dot_dimension_numbers<[1], [0], [0], [1], [0, 0, 1, 1], [], []>} : vector<1x128xf32>, vector<128x128xf32>, vector<1x128xf32> -> vector<1x128xf32>
    %13 = vector.broadcast %12 : vector<1x128xf32> to vector<32x128xf32>
    %14 = arith.subf %9, %13 : vector<32x128xf32>
    %15 = arith.mulf %14, %14 : vector<32x128xf32>
    %cst_10 = arith.constant dense<0.000000e+00> : vector<128xf32>
    %16 = vector.multi_reduction <add>, %15, %cst_10 [0] : vector<32x128xf32> to vector<128xf32>
    %17 = vector.shape_cast %16 : vector<128xf32> to vector<1x128xf32>
    %cst_11 = arith.constant dense<0.000000e+00> : vector<1x128xf32>
    %18 = tpu.matmul %17, %1, %cst_11 {dimension_numbers = #tpu.dot_dimension_numbers<[1], [0], [0], [1], [0, 0, 1, 1], [], []>} : vector<1x128xf32>, vector<128x128xf32>, vector<1x128xf32> -> vector<1x128xf32>
    %cst_12 = arith.constant 9.99999974E-6 : f32
    %19 = vector.broadcast %cst_12 : f32 to vector<1x128xf32>
    %20 = arith.addf %18, %19 : vector<1x128xf32>
    %21 = math.rsqrt %20 : vector<1x128xf32>
    %c0_13 = arith.constant 0 : index
    %c0_14 = arith.constant 0 : index
    %22 = vector.load %arg3[%c0_13, %c0_14] : memref<1x128xf32, #tpu.memory_space<vmem>>, vector<1x128xf32>
    %23 = arith.mulf %22, %21 : vector<1x128xf32>
    %24 = vector.broadcast %23 : vector<1x128xf32> to vector<32x128xf32>
    %25 = arith.mulf %14, %24 : vector<32x128xf32>
    %c0_15 = arith.constant 0 : index
    %c0_16 = arith.constant 0 : index
    %26 = vector.load %arg4[%c0_15, %c0_16] : memref<1x128xf32, #tpu.memory_space<vmem>>, vector<1x128xf32>
    %27 = vector.broadcast %26 : vector<1x128xf32> to vector<32x128xf32>
    %28 = arith.addf %25, %27 : vector<32x128xf32>
    %cst_17 = arith.constant 0.000000e+00 : f32
    %29 = vector.broadcast %cst_17 : f32 to vector<32x128xf32>
    %30 = arith.maximumf %28, %29 : vector<32x128xf32>
    %cst_18 = arith.constant dense<0.000000e+00> : vector<64x128xf32>
    %31 = tpu.matmul %2, %30, %cst_18 {dimension_numbers = #tpu.dot_dimension_numbers<[1], [0], [0], [1], [0, 0, 1, 1], [], []>} : vector<64x32xf32>, vector<32x128xf32>, vector<64x128xf32> -> vector<64x128xf32>
    %32 = vector.extract_strided_slice %31 {offsets = [0, 0], sizes = [32, 128], strides = [1, 1]} : vector<64x128xf32> to vector<32x128xf32>
    %33 = vector.extract_strided_slice %31 {offsets = [32, 0], sizes = [32, 128], strides = [1, 1]} : vector<64x128xf32> to vector<32x128xf32>
    %34 = tpu.concatenate %32, %30, %33 in 1 : vector<32x128xf32>, vector<32x128xf32>, vector<32x128xf32> -> vector<32x384xf32>
    %35 = arith.truncf %34 : vector<32x384xf32> to vector<32x384xbf16>
    %c0_19 = arith.constant 0 : index
    %c0_20 = arith.constant 0 : index
    %36 = vector.load %arg5[%c0_19, %c0_20] : memref<384x128xbf16, #tpu.memory_space<vmem>>, vector<384x128xbf16>
    %cst_21 = arith.constant dense<0.000000e+00> : vector<32x128xf32>
    %37 = tpu.matmul %35, %36, %cst_21 {dimension_numbers = #tpu.dot_dimension_numbers<[1], [0], [0], [1], [0, 0, 1, 1], [], []>} : vector<32x384xbf16>, vector<384x128xbf16>, vector<32x128xf32> -> vector<32x128xf32>
    %cst_22 = arith.constant dense<0.000000e+00> : vector<128xf32>
    %38 = vector.multi_reduction <add>, %37, %cst_22 [0] : vector<32x128xf32> to vector<128xf32>
    %39 = vector.shape_cast %38 : vector<128xf32> to vector<1x128xf32>
    %cst_23 = arith.constant dense<0.000000e+00> : vector<1x128xf32>
    %40 = tpu.matmul %39, %1, %cst_23 {dimension_numbers = #tpu.dot_dimension_numbers<[1], [0], [0], [1], [0, 0, 1, 1], [], []>} : vector<1x128xf32>, vector<128x128xf32>, vector<1x128xf32> -> vector<1x128xf32>
    %41 = vector.broadcast %40 : vector<1x128xf32> to vector<32x128xf32>
    %42 = arith.subf %37, %41 : vector<32x128xf32>
    %43 = arith.mulf %42, %42 : vector<32x128xf32>
    %cst_24 = arith.constant dense<0.000000e+00> : vector<128xf32>
    %44 = vector.multi_reduction <add>, %43, %cst_24 [0] : vector<32x128xf32> to vector<128xf32>
    %45 = vector.shape_cast %44 : vector<128xf32> to vector<1x128xf32>
    %cst_25 = arith.constant dense<0.000000e+00> : vector<1x128xf32>
    %46 = tpu.matmul %45, %1, %cst_25 {dimension_numbers = #tpu.dot_dimension_numbers<[1], [0], [0], [1], [0, 0, 1, 1], [], []>} : vector<1x128xf32>, vector<128x128xf32>, vector<1x128xf32> -> vector<1x128xf32>
    %cst_26 = arith.constant 9.99999974E-6 : f32
    %47 = vector.broadcast %cst_26 : f32 to vector<1x128xf32>
    %48 = arith.addf %46, %47 : vector<1x128xf32>
    %49 = math.rsqrt %48 : vector<1x128xf32>
    %c0_27 = arith.constant 0 : index
    %c0_28 = arith.constant 0 : index
    %50 = vector.load %arg6[%c0_27, %c0_28] : memref<1x128xf32, #tpu.memory_space<vmem>>, vector<1x128xf32>
    %51 = arith.mulf %50, %49 : vector<1x128xf32>
    %52 = vector.broadcast %51 : vector<1x128xf32> to vector<32x128xf32>
    %53 = arith.mulf %42, %52 : vector<32x128xf32>
    %c0_29 = arith.constant 0 : index
    %c0_30 = arith.constant 0 : index
    %54 = vector.load %arg7[%c0_29, %c0_30] : memref<1x128xf32, #tpu.memory_space<vmem>>, vector<1x128xf32>
    %55 = vector.broadcast %54 : vector<1x128xf32> to vector<32x128xf32>
    %56 = arith.addf %53, %55 : vector<32x128xf32>
    %57 = arith.addf %56, %0 : vector<32x128xf32>
    %cst_31 = arith.constant 0.000000e+00 : f32
    %58 = vector.broadcast %cst_31 : f32 to vector<32x128xf32>
    %59 = arith.maximumf %57, %58 : vector<32x128xf32>
    %c0_32 = arith.constant 0 : index
    %c0_33 = arith.constant 0 : index
    %60 = vector.load %arg10[%c0_32, %c0_33] : memref<32x128xf32, #tpu.memory_space<vmem>>, vector<32x128xf32>
    tpu.vector_store %arg10[%c0_32, %c0_33], %59 {strides = array<i32>} : memref<32x128xf32, #tpu.memory_space<vmem>>, vector<32x128xf32>,
    return
  }
  func.func @transform_0(%arg0: i32) -> (i32, i32) {
    %c0_i32 = arith.constant 0 : i32
    %c0_i32_0 = arith.constant 0 : i32
    %c0_i32_1 = arith.constant 0 : i32
    return %c0_i32, %c0_i32_0 : i32, i32
  }
  func.func @transform_1(%arg0: i32) -> (i32, i32) {
    %c0_i32 = arith.constant 0 : i32
    %c0_i32_0 = arith.constant 0 : i32
    %c0_i32_1 = arith.constant 0 : i32
    return %c0_i32, %c0_i32_0 : i32, i32
  }
  func.func @transform_2(%arg0: i32) -> (i32, i32) {
    %c0_i32 = arith.constant 0 : i32
    %c0_i32_0 = arith.constant 0 : i32
    %c0_i32_1 = arith.constant 0 : i32
    return %c0_i32, %c0_i32_0 : i32, i32
  }
  func.func @transform_3(%arg0: i32) -> (i32, i32) {
    %c0_i32 = arith.constant 0 : i32
    %c0_i32_0 = arith.constant 0 : i32
    %c0_i32_1 = arith.constant 0 : i32
    return %c0_i32, %c0_i32_0 : i32, i32
  }
  func.func @transform_4(%arg0: i32) -> (i32, i32) {
    %c0_i32 = arith.constant 0 : i32
    %c0_i32_0 = arith.constant 0 : i32
    %c0_i32_1 = arith.constant 0 : i32
    return %c0_i32, %c0_i32_0 : i32, i32
  }
  func.func @transform_5(%arg0: i32) -> (i32, i32) {
    %c0_i32 = arith.constant 0 : i32
    %c0_i32_0 = arith.constant 0 : i32
    %c0_i32_1 = arith.constant 0 : i32
    return %c0_i32, %c0_i32_0 : i32, i32
  }
  func.func @transform_6(%arg0: i32) -> (i32, i32) {
    %c0_i32 = arith.constant 0 : i32
    %c0_i32_0 = arith.constant 0 : i32
    %c0_i32_1 = arith.constant 0 : i32
    return %c0_i32, %c0_i32_0 : i32, i32
  }
  func.func @transform_7(%arg0: i32) -> (i32, i32) {
    %c0_i32 = arith.constant 0 : i32
    %c0_i32_0 = arith.constant 0 : i32
    %c0_i32_1 = arith.constant 0 : i32
    return %c0_i32, %c0_i32_0 : i32, i32
  }
  func.func @transform_8(%arg0: i32) -> (i32, i32) {
    %c0_i32 = arith.constant 0 : i32
    %c0_i32_0 = arith.constant 0 : i32
    %c0_i32_1 = arith.constant 0 : i32
    return %c0_i32, %c0_i32_0 : i32, i32
  }
  func.func @transform_9(%arg0: i32) -> (i32, i32) {
    %c0_i32 = arith.constant 0 : i32
    %c0_i32_0 = arith.constant 0 : i32
    %c0_i32_1 = arith.constant 0 : i32
    return %c0_i32, %c0_i32_0 : i32, i32
  }
}

</mosaic_0001>

<llo_original>
// kernel: tile.23
$region0: #{tile.23}
  #allocation0 [shape = 's32[1]{0}', space=sflag, size = 0x4, scoped, tag = 'scoped memory for tile.23']
  %s0 = inlined_call_operand.vmem [shape: f32[8], index: 0, kind: input, shape index: {}]
  %s1 = inlined_call_operand.vmem [shape: f32[16,8], index: 1, kind: output, shape index: {}]
  // Predicated region
  $region2: #{tile.23} parent=0 // pred_check
    _
  $region3: #{tile.23} parent=0 // pred_check_branch
    %3 = sbr.rel (0) target = $region5
  $region4: #{tile.23} parent=0 // pred_region
    _
  $region5: #{tile.23} parent=0 // pred_fallthru
    _
  %v4 = vld [vmem:[%s0] ss:$0 sm:$0xff]
  %5 = vst [vmem:[%s1] sm:$0xff] %v4
  %s6 = scalar_lea.vmem %s1, 8
  %7 = vst [vmem:[%s6] sm:$0xff] %v4

// kernel: tile.24
$region0: #{tile.24}
  %s0 = inlined_call_operand.vmem [shape: f32[16,8], index: 0, kind: input, shape index: {}]
  %s1 = inlined_call_operand.vmem [shape: f32[1,128], index: 1, kind: output, shape index: {}]
  $region1: #{tile.24} parent=0
    #allocation0 [shape = 'u8[4096]{0}', space=vmem, size = 0x1000, scoped, tag = 'scoped mem for output reshape']
    %v2 = vld [vmem:[%s0] sm:$0x1]
    %vm3 = vcmask 64512
    %4 = vst.msk [vmem:[#allocation0] sm:$0x1] %vm3, %v2
    %s5 = scalar_lea.vmem %s0, 15
    %v6 = vld [vmem:[%s5] sm:$0x1]
    %7 = vrot.lane.b32.xlu0 %v6, 120
    %v8 = vpop.permute.xlu0 %7
    %vm9 = vcmask 1048512
    %10 = vst.msk [vmem:[#allocation0] sm:$0x1] %vm9, %v8
    %s11 = scalar_lea.vmem %s0, 14
    %v12 = vld [vmem:[%s11] sm:$0x1]
    %13 = vrot.lane.b32.xlu0 %v12, 112
    %v14 = vpop.permute.xlu0 %13
    %vm15 = vcmask 982912
    %16 = vst.msk [vmem:[#allocation0] sm:$0x1] %vm15, %v14
    %s17 = scalar_lea.vmem %s0, 13
    %v18 = vld [vmem:[%s17] sm:$0x1]
    %19 = vrot.lane.b32.xlu0 %v18, 104
    %v20 = vpop.permute.xlu0 %19
    %vm21 = vcmask 917312
    %22 = vst.msk [vmem:[#allocation0] sm:$0x1] %vm21, %v20
    %s23 = scalar_lea.vmem %s0, 12
    %v24 = vld [vmem:[%s23] sm:$0x1]
    %25 = vrot.lane.b32.xlu0 %v24, 96
    %v26 = vpop.permute.xlu0 %25
    %vm27 = vcmask 851712
    %28 = vst.msk [vmem:[#allocation0] sm:$0x1] %vm27, %v26
    %s29 = scalar_lea.vmem %s0, 11
    %v30 = vld [vmem:[%s29] sm:$0x1]
    %31 = vrot.lane.b32.xlu0 %v30, 88
    %v32 = vpop.permute.xlu0 %31
    %vm33 = vcmask 786112
    %34 = vst.msk [vmem:[#allocation0] sm:$0x1] %vm33, %v32
    %s35 = scalar_lea.vmem %s0, 10
    %v36 = vld [vmem:[%s35] sm:$0x1]
    %37 = vrot.lane.b32.xlu0 %v36, 80
    %v38 = vpop.permute.xlu0 %37
    %vm39 = vcmask 720512
    %40 = vst.msk [vmem:[#allocation0] sm:$0x1] %vm39, %v38
    %s41 = scalar_lea.vmem %s0, 9
    %v42 = vld [vmem:[%s41] sm:$0x1]
    %43 = vrot.lane.b32.xlu0 %v42, 72
    %v44 = vpop.permute.xlu0 %43
    %vm45 = vcmask 654912
    %46 = vst.msk [vmem:[#allocation0] sm:$0x1] %vm45, %v44
    %s47 = scalar_lea.vmem %s0, 8
    %v48 = vld [vmem:[%s47] sm:$0x1]
    %49 = vrot.lane.b32.xlu0 %v48, 64
    %v50 = vpop.permute.xlu0 %49
    %vm51 = vcmask 589312
    %52 = vst.msk [vmem:[#allocation0] sm:$0x1] %vm51, %v50
    %s53 = scalar_lea.vmem %s0, 7
    %v54 = vld [vmem:[%s53] sm:$0x1]
    %55 = vrot.lane.b32.xlu0 %v54, 56
    %v56 = vpop.permute.xlu0 %55
    %vm57 = vcmask 523712
    %58 = vst.msk [vmem:[#allocation0] sm:$0x1] %vm57, %v56
    %s59 = scalar_lea.vmem %s0, 6
    %v60 = vld [vmem:[%s59] sm:$0x1]
    %61 = vrot.lane.b32.xlu0 %v60, 48
    %v62 = vpop.permute.xlu0 %61
    %vm63 = vcmask 458112
    %64 = vst.msk [vmem:[#allocation0] sm:$0x1] %vm63, %v62
    %s65 = scalar_lea.vmem %s0, 5
    %v66 = vld [vmem:[%s65] sm:$0x1]
    %67 = vrot.lane.b32.xlu0 %v66, 40
    %v68 = vpop.permute.xlu0 %67
    %vm69 = vcmask 392512
    %70 = vst.msk [vmem:[#allocation0] sm:$0x1] %vm69, %v68
    %s71 = scalar_lea.vmem %s0, 4
    %v72 = vld [vmem:[%s71] sm:$0x1]
    %73 = vrot.lane.b32.xlu0 %v72, 32
    %v74 = vpop.permute.xlu0 %73
    %vm75 = vcmask 326912
    %76 = vst.msk [vmem:[#allocation0] sm:$0x1] %vm75, %v74
    %s77 = scalar_lea.vmem %s0, 3
    %v78 = vld [vmem:[%s77] sm:$0x1]
    %79 = vrot.lane.b32.xlu0 %v78, 24
    %v80 = vpop.permute.xlu0 %79
    %vm81 = vcmask 261312
    %82 = vst.msk [vmem:[#allocation0] sm:$0x1] %vm81, %v80
    %s83 = scalar_lea.vmem %s0, 2
    %v84 = vld [vmem:[%s83] sm:$0x1]
    %85 = vrot.lane.b32.xlu0 %v84, 16
    %v86 = vpop.permute.xlu0 %85
    %vm87 = vcmask 195712
    %88 = vst.msk [vmem:[#allocation0] sm:$0x1] %vm87, %v86
    %s89 = scalar_lea.vmem %s0, 1
    %v90 = vld [vmem:[%s89] sm:$0x1]
    %91 = vrot.lane.b32.xlu0 %v90, 8
    %v92 = vpop.permute.xlu0 %91
    %vm93 = vcmask 130112
    %94 = vst.msk [vmem:[#allocation0] sm:$0x1] %vm93, %v92
    %s96 = sshll.u32 1, 1
    %s97 = ssub.s32 %s96, 1
    %v99 = vld [vmem:[#allocation0] sm:%s97]
    %s100 = sshll.u32 1, 1
    %s101 = ssub.s32 %s100, 1
    %102 = vst [vmem:[%s1] sm:%s101] %v99

// kernel: basic_block_forward.1
$region0: #{basic_block_forward.1}
  #allocation0 [shape = 'u32[]', space=smem, size = 0x4, offset = 0x4, fixed_abs, tag = 'smem constant byte address 0x4 - core index']
  #allocation1 [shape = 'u32[144,128]{1,0:T(1,128)}', space=vmem, size = 0x12000, scoped, tag = 'internal scratch']
  %s0 = inlined_call_operand.vmem [shape: f32[32,128], index: 0, kind: input, shape index: {}]
  %s1 = inlined_call_operand.vmem [shape: bf16[384,128], index: 1, kind: input, shape index: {}]
  %s2 = inlined_call_operand.vmem [shape: f32[1,128], index: 2, kind: input, shape index: {}]
  %s3 = inlined_call_operand.vmem [shape: f32[1,128], index: 3, kind: input, shape index: {}]
  %s4 = inlined_call_operand.vmem [shape: bf16[384,128], index: 4, kind: input, shape index: {}]
  %s5 = inlined_call_operand.vmem [shape: f32[1,128], index: 5, kind: input, shape index: {}]
  %s6 = inlined_call_operand.vmem [shape: f32[1,128], index: 6, kind: input, shape index: {}]
  %s7 = inlined_call_operand.vmem [shape: f32[128,128], index: 7, kind: input, shape index: {}]
  %s8 = inlined_call_operand.vmem [shape: f32[64,32], index: 8, kind: input, shape index: {}]
  %s9 = inlined_call_operand.vmem [shape: f32[32,128], index: 9, kind: output, shape index: {}]
  %s10 = sld [smem:[#allocation0]]
  $region46: #{basic_block_forward.1} parent=0
    _
  %s12 = ssub.s32 1, %s10
  %s13 = scalar_select 0, %s12, %s10
  // Predicated region
  $region2: #{basic_block_forward.1} parent=0 // pred_check
    _
  $region3: #{basic_block_forward.1} parent=0 // pred_check_branch
    %15 = sbr.rel (0) target = $region5
  $region4: #{basic_block_forward.1} parent=0 // pred_region
    _
  $region5: #{basic_block_forward.1} parent=0 // pred_fallthru
    _
  // Predicated region
  $region6: #{basic_block_forward.1} parent=0 // pred_check
    _
  $region7: #{basic_block_forward.1} parent=0 // pred_check_branch
    %17 = sbr.rel (0) target = $region9
  $region8: #{basic_block_forward.1} parent=0 // pred_region
    _
  $region9: #{basic_block_forward.1} parent=0 // pred_fallthru
    _
  // Predicated region
  $region10: #{basic_block_forward.1} parent=0 // pred_check
    _
  $region11: #{basic_block_forward.1} parent=0 // pred_check_branch
    %19 = sbr.rel (0) target = $region13
  $region12: #{basic_block_forward.1} parent=0 // pred_region
    _
  $region13: #{basic_block_forward.1} parent=0 // pred_fallthru
    _
  // Predicated region
  $region14: #{basic_block_forward.1} parent=0 // pred_check
    _
  $region15: #{basic_block_forward.1} parent=0 // pred_check_branch
    %21 = sbr.rel (0) target = $region17
  $region16: #{basic_block_forward.1} parent=0 // pred_region
    _
  $region17: #{basic_block_forward.1} parent=0 // pred_fallthru
    _
  // Predicated region
  $region18: #{basic_block_forward.1} parent=0 // pred_check
    _
  $region19: #{basic_block_forward.1} parent=0 // pred_check_branch
    %23 = sbr.rel (0) target = $region21
  $region20: #{basic_block_forward.1} parent=0 // pred_region
    _
  $region21: #{basic_block_forward.1} parent=0 // pred_fallthru
    _
  // Predicated region
  $region22: #{basic_block_forward.1} parent=0 // pred_check
    _
  $region23: #{basic_block_forward.1} parent=0 // pred_check_branch
    %25 = sbr.rel (0) target = $region25
  $region24: #{basic_block_forward.1} parent=0 // pred_region
    _
  $region25: #{basic_block_forward.1} parent=0 // pred_fallthru
    _
  // Predicated region
  $region26: #{basic_block_forward.1} parent=0 // pred_check
    _
  $region27: #{basic_block_forward.1} parent=0 // pred_check_branch
    %27 = sbr.rel (0) target = $region29
  $region28: #{basic_block_forward.1} parent=0 // pred_region
    _
  $region29: #{basic_block_forward.1} parent=0 // pred_fallthru
    _
  // Predicated region
  $region30: #{basic_block_forward.1} parent=0 // pred_check
    _
  $region31: #{basic_block_forward.1} parent=0 // pred_check_branch
    %29 = sbr.rel (0) target = $region33
  $region32: #{basic_block_forward.1} parent=0 // pred_region
    _
  $region33: #{basic_block_forward.1} parent=0 // pred_fallthru
    _
  // Predicated region
  $region34: #{basic_block_forward.1} parent=0 // pred_check
    _
  $region35: #{basic_block_forward.1} parent=0 // pred_check_branch
    %31 = sbr.rel (0) target = $region37
  $region36: #{basic_block_forward.1} parent=0 // pred_region
    _
  $region37: #{basic_block_forward.1} parent=0 // pred_fallthru
    _
  %v33 = vld [vmem:[%s0] sm:$0xff]
  %v34 = vld [vmem:[%s0 + $0x8] sm:$0xff]
  %v35 = vld [vmem:[%s0 + $0x10] sm:$0xff]
  %v36 = vld [vmem:[%s0 + $0x18] sm:$0xff]
  %v37 = vld [vmem:[%s7] sm:$0xff]
  %v38 = vld [vmem:[%s7 + $0x8] sm:$0xff]
  %v39 = vld [vmem:[%s7 + $0x10] sm:$0xff]
  %v40 = vld [vmem:[%s7 + $0x18] sm:$0xff]
  %v41 = vld [vmem:[%s7 + $0x20] sm:$0xff]
  %v42 = vld [vmem:[%s7 + $0x28] sm:$0xff]
  %v43 = vld [vmem:[%s7 + $0x30] sm:$0xff]
  %v44 = vld [vmem:[%s7 + $0x38] sm:$0xff]
  %v45 = vld [vmem:[%s7 + $0x40] sm:$0xff]
  %v46 = vld [vmem:[%s7 + $0x48] sm:$0xff]
  %v47 = vld [vmem:[%s7 + $0x50] sm:$0xff]
  %v48 = vld [vmem:[%s7 + $0x58] sm:$0xff]
  %v49 = vld [vmem:[%s7 + $0x60] sm:$0xff]
  %v50 = vld [vmem:[%s7 + $0x68] sm:$0xff]
  %v51 = vld [vmem:[%s7 + $0x70] sm:$0xff]
  %v52 = vld [vmem:[%s7 + $0x78] sm:$0xff]
  %v53 = vld [vmem:[%s8] sm:$0xff]
  %v54 = vld [vmem:[%s8 + $0x8] sm:$0xff]
  %v55 = vld [vmem:[%s8 + $0x10] sm:$0xff]
  %v56 = vld [vmem:[%s8 + $0x18] sm:$0xff]
  %v57 = vld [vmem:[%s8 + $0x20] sm:$0xff]
  %v58 = vld [vmem:[%s8 + $0x28] sm:$0xff]
  %v59 = vld [vmem:[%s8 + $0x30] sm:$0xff]
  %v60 = vld [vmem:[%s8 + $0x38] sm:$0xff]
  %vm61 = vcmask 261120
  %v63 = vsel %vm61, %v53, 0
  %v66 = vsel %vm61, %v54, 0
  %v69 = vsel %vm61, %v55, 0
  %v72 = vsel %vm61, %v56, 0
  %v75 = vsel %vm61, %v57, 0
  %v78 = vsel %vm61, %v58, 0
  %v81 = vsel %vm61, %v59, 0
  %v84 = vsel %vm61, %v60, 0
  %86 = vmatprep.subr.mxu0 0.0
  %87 = vmatpush1.msra.mxu0 0.0
  %88 = vmatprep.subr.mxu0 0.0
  %89 = vmatpush1.msra.mxu0 0.0
  %90 = vmatprep.subr.mxu0 0.0
  %91 = vmatpush1.msra.mxu0 0.0
  %92 = vmatprep.subr.mxu0 0.0
  %93 = vmatpush1.msra.mxu0 0.0
  %94 = vmatprep.subr.mxu0 0.0
  %95 = vmatpush1.msra.mxu0 0.0
  %96 = vmatprep.subr.mxu0 0.0
  %97 = vmatpush1.msra.mxu0 0.0
  %98 = vmatprep.subr.mxu0 0.0
  %99 = vmatpush1.msra.mxu0 0.0
  %100 = vmatprep.subr.mxu0 0.0
  %101 = vmatpush1.msra.mxu0 0.0
  %102 = vmatprep.subr.mxu0 0.0
  %103 = vmatpush1.msra.mxu0 0.0
  %104 = vmatprep.subr.mxu0 0.0
  %105 = vmatpush1.msra.mxu0 0.0
  %106 = vmatprep.subr.mxu0 0.0
  %107 = vmatpush1.msra.mxu0 0.0
  %108 = vmatprep.subr.mxu0 0.0
  %109 = vmatpush1.msra.mxu0 0.0
  %110 = vmatprep.subr.mxu0 0.0
  %111 = vmatpush1.msra.mxu0 %v36
  %112 = vmatprep.subr.mxu0 0.0
  %113 = vmatpush1.msra.mxu0 %v35
  %114 = vmatprep.subr.mxu0 0.0
  %115 = vmatpush1.msra.mxu0 %v34
  %116 = vmatprep.subr.mxu0 0.0
  %117 = vmatpush1.msra.mxu0 %v33
  %118 = vmatprep.subr.mxu0 0.0
  %119 = vmatpush2.msra.mxu0 0.0
  %120 = vmatprep.subr.mxu0 0.0
  %121 = vmatpush2.msra.mxu0 0.0
  %122 = vmatprep.subr.mxu0 0.0
  %123 = vmatpush2.msra.mxu0 0.0
  %124 = vmatprep.subr.mxu0 0.0
  %125 = vmatpush2.msra.mxu0 0.0
  %126 = vmatprep.subr.mxu0 0.0
  %127 = vmatpush2.msra.mxu0 0.0
  %128 = vmatprep.subr.mxu0 0.0
  %129 = vmatpush2.msra.mxu0 0.0
  %130 = vmatprep.subr.mxu0 0.0
  %131 = vmatpush2.msra.mxu0 0.0
  %132 = vmatprep.subr.mxu0 0.0
  %133 = vmatpush2.msra.mxu0 0.0
  %134 = vmatprep.subr.mxu0 0.0
  %135 = vmatpush2.msra.mxu0 0.0
  %136 = vmatprep.subr.mxu0 0.0
  %137 = vmatpush2.msra.mxu0 0.0
  %138 = vmatprep.subr.mxu0 0.0
  %139 = vmatpush2.msra.mxu0 0.0
  %140 = vmatprep.subr.mxu0 0.0
  %141 = vmatpush2.msra.mxu0 0.0
  %142 = vmatprep.subr.mxu0 0.0
  %143 = vmatpush2.msra.mxu0 0.0
  %144 = vmatprep.subr.mxu0 0.0
  %145 = vmatpush2.msra.mxu0 0.0
  %146 = vmatprep.subr.mxu0 0.0
  %147 = vmatpush2.msra.mxu0 0.0
  %148 = vmatprep.subr.mxu0 0.0
  %149 = vmatpush2.msra.mxu0 0.0
  %150 = vmatprep.mubr.f32.mxu0 0.0
  %151 = vmatmul.mubr.f32.gmra.mxu0 %v63
  %v152 = vpop.f32.mrf.mxu0
  %v153 = vadd.f32 0.0, %v152
  %v154 = vpop.f32.mrf.mxu0
  %155 = vmatprep.mubr.f32.mxu0 0.0
  %156 = vmatmul.mubr.f32.gmra.mxu0 %v66
  %v157 = vpop.f32.mrf.mxu0
  %v158 = vadd.f32 0.0, %v157
  %v159 = vpop.f32.mrf.mxu0
  %160 = vmatprep.mubr.f32.mxu0 0.0
  %161 = vmatmul.mubr.f32.gmra.mxu0 %v69
  %v162 = vpop.f32.mrf.mxu0
  %v163 = vadd.f32 0.0, %v162
  %v164 = vpop.f32.mrf.mxu0
  %165 = vmatprep.mubr.f32.mxu0 0.0
  %166 = vmatmul.mubr.f32.gmra.mxu0 %v72
  %v167 = vpop.f32.mrf.mxu0
  %v168 = vadd.f32 0.0, %v167
  %v169 = vpop.f32.mrf.mxu0
  %170 = vmatprep.mubr.f32.mxu0 0.0
  %171 = vmatmul.mubr.f32.gmra.mxu0 %v75
  %v172 = vpop.f32.mrf.mxu0
  %v173 = vadd.f32 0.0, %v172
  %v174 = vpop.f32.mrf.mxu0
  %175 = vmatprep.mubr.f32.mxu0 0.0
  %176 = vmatmul.mubr.f32.gmra.mxu0 %v78
  %v177 = vpop.f32.mrf.mxu0
  %v178 = vadd.f32 0.0, %v177
  %v179 = vpop.f32.mrf.mxu0
  %180 = vmatprep.mubr.f32.mxu0 0.0
  %181 = vmatmul.mubr.f32.gmra.mxu0 %v81
  %v182 = vpop.f32.mrf.mxu0
  %v183 = vadd.f32 0.0, %v182
  %v184 = vpop.f32.mrf.mxu0
  %185 = vmatprep.mubr.f32.mxu0 0.0
  %186 = vmatmul.mubr.f32.gmra.mxu0 %v84
  %v187 = vpop.f32.mrf.mxu0
  %v188 = vadd.f32 0.0, %v187
  %v189 = vpop.f32.mrf.mxu0
  %190 = vdwg.mxu0
  %v191 = vpack.c.bf16 %v158, %v153
  %v192 = vpack.c.bf16 %v34, %v33
  %v193 = vpack.c.bf16 %v178, %v173
  %v194 = vpack.c.bf16 %v168, %v163
  %v195 = vpack.c.bf16 %v36, %v35
  %v196 = vpack.c.bf16 %v188, %v183
  %v197 = vld [vmem:[%s1] sm:$0xf]
  %v198 = vld [vmem:[%s1 + $0x4] sm:$0xf]
  %v199 = vld [vmem:[%s1 + $0x8] sm:$0xf]
  %v200 = vld [vmem:[%s1 + $0xc] sm:$0xf]
  %v201 = vld [vmem:[%s1 + $0x10] sm:$0xf]
  %v202 = vld [vmem:[%s1 + $0x14] sm:$0xf]
  %v203 = vld [vmem:[%s1 + $0x18] sm:$0xf]
  %v204 = vld [vmem:[%s1 + $0x1c] sm:$0xf]
  %v205 = vld [vmem:[%s1 + $0x20] sm:$0xf]
  %v206 = vld [vmem:[%s1 + $0x24] sm:$0xf]
  %v207 = vld [vmem:[%s1 + $0x28] sm:$0xf]
  %v208 = vld [vmem:[%s1 + $0x2c] sm:$0xf]
  %v209 = vld [vmem:[%s1 + $0x30] sm:$0xf]
  %v210 = vld [vmem:[%s1 + $0x34] sm:$0xf]
  %v211 = vld [vmem:[%s1 + $0x38] sm:$0xf]
  %v212 = vld [vmem:[%s1 + $0x3c] sm:$0xf]
  %v213 = vld [vmem:[%s1 + $0x40] sm:$0xf]
  %v214 = vld [vmem:[%s1 + $0x44] sm:$0xf]
  %v215 = vld [vmem:[%s1 + $0x48] sm:$0xf]
  %v216 = vld [vmem:[%s1 + $0x4c] sm:$0xf]
  %v217 = vld [vmem:[%s1 + $0x50] sm:$0xf]
  %v218 = vld [vmem:[%s1 + $0x54] sm:$0xf]
  %v219 = vld [vmem:[%s1 + $0x58] sm:$0xf]
  %v220 = vld [vmem:[%s1 + $0x5c] sm:$0xf]
  %v221 = vld [vmem:[%s1 + $0x60] sm:$0xf]
  %v222 = vld [vmem:[%s1 + $0x64] sm:$0xf]
  %v223 = vld [vmem:[%s1 + $0x68] sm:$0xf]
  %v224 = vld [vmem:[%s1 + $0x6c] sm:$0xf]
  %v225 = vld [vmem:[%s1 + $0x70] sm:$0xf]
  %v226 = vld [vmem:[%s1 + $0x74] sm:$0xf]
  %v227 = vld [vmem:[%s1 + $0x78] sm:$0xf]
  %v228 = vld [vmem:[%s1 + $0x7c] sm:$0xf]
  %v229 = vld [vmem:[%s1 + $0x80] sm:$0xf]
  %v230 = vld [vmem:[%s1 + $0x84] sm:$0xf]
  %v231 = vld [vmem:[%s1 + $0x88] sm:$0xf]
  %v232 = vld [vmem:[%s1 + $0x8c] sm:$0xf]
  %v233 = vld [vmem:[%s1 + $0x90] sm:$0xf]
  %v234 = vld [vmem:[%s1 + $0x94] sm:$0xf]
  %v235 = vld [vmem:[%s1 + $0x98] sm:$0xf]
  %v236 = vld [vmem:[%s1 + $0x9c] sm:$0xf]
  %v237 = vld [vmem:[%s1 + $0xa0] sm:$0xf]
  %v238 = vld [vmem:[%s1 + $0xa4] sm:$0xf]
  %v239 = vld [vmem:[%s1 + $0xa8] sm:$0xf]
  %v240 = vld [vmem:[%s1 + $0xac] sm:$0xf]
  %v241 = vld [vmem:[%s1 + $0xb0] sm:$0xf]
  %v242 = vld [vmem:[%s1 + $0xb4] sm:$0xf]
  %v243 = vld [vmem:[%s1 + $0xb8] sm:$0xf]
  %v244 = vld [vmem:[%s1 + $0xbc] sm:$0xf]
  %v293 = vunpack.c.l.b16 %v197
  %v294 = vunpack.c.l.b16 %v198
  %v295 = vunpack.c.l.b16 %v199
  %v296 = vunpack.c.l.b16 %v200
  %v297 = vunpack.c.l.b16 %v201
  %v298 = vunpack.c.l.b16 %v202
  %v299 = vunpack.c.l.b16 %v203
  %v300 = vunpack.c.l.b16 %v204
  %v301 = vunpack.c.l.b16 %v205
  %v302 = vunpack.c.l.b16 %v206
  %v303 = vunpack.c.l.b16 %v207
  %v304 = vunpack.c.l.b16 %v208
  %v305 = vunpack.c.l.b16 %v209
  %v306 = vunpack.c.l.b16 %v210
  %v307 = vunpack.c.l.b16 %v211
  %v308 = vunpack.c.l.b16 %v212
  %v309 = vunpack.c.l.b16 %v213
  %v310 = vunpack.c.l.b16 %v214
  %v311 = vunpack.c.l.b16 %v215
  %v312 = vunpack.c.l.b16 %v216
  %v313 = vunpack.c.l.b16 %v217
  %v314 = vunpack.c.l.b16 %v218
  %v315 = vunpack.c.l.b16 %v219
  %v316 = vunpack.c.l.b16 %v220
  %v317 = vunpack.c.l.b16 %v221
  %v318 = vunpack.c.l.b16 %v222
  %v319 = vunpack.c.l.b16 %v223
  %v320 = vunpack.c.l.b16 %v224
  %v321 = vunpack.c.l.b16 %v225
  %v322 = vunpack.c.l.b16 %v226
  %v323 = vunpack.c.l.b16 %v227
  %v324 = vunpack.c.l.b16 %v228
  %v325 = vunpack.c.l.b16 %v229
  %v326 = vunpack.c.l.b16 %v230
  %v327 = vunpack.c.l.b16 %v231
  %v328 = vunpack.c.l.b16 %v232
  %v329 = vunpack.c.l.b16 %v233
  %v330 = vunpack.c.l.b16 %v234
  %v331 = vunpack.c.l.b16 %v235
  %v332 = vunpack.c.l.b16 %v236
  %v333 = vunpack.c.l.b16 %v237
  %v334 = vunpack.c.l.b16 %v238
  %v335 = vunpack.c.l.b16 %v239
  %v336 = vunpack.c.l.b16 %v240
  %v337 = vunpack.c.l.b16 %v241
  %v338 = vunpack.c.l.b16 %v242
  %v339 = vunpack.c.l.b16 %v243
  %v340 = vunpack.c.l.b16 %v244
  %v341 = vpack.c.b16 %v294, %v293
  %v342 = vpack.c.b16 %v296, %v295
  %v343 = vpack.c.b16 %v298, %v297
  %v344 = vpack.c.b16 %v300, %v299
  %v345 = vpack.c.b16 %v302, %v301
  %v346 = vpack.c.b16 %v304, %v303
  %v347 = vpack.c.b16 %v306, %v305
  %v348 = vpack.c.b16 %v308, %v307
  %v349 = vpack.c.b16 %v310, %v309
  %v350 = vpack.c.b16 %v312, %v311
  %v351 = vpack.c.b16 %v314, %v313
  %v352 = vpack.c.b16 %v316, %v315
  %v353 = vpack.c.b16 %v318, %v317
  %v354 = vpack.c.b16 %v320, %v319
  %v355 = vpack.c.b16 %v322, %v321
  %v356 = vpack.c.b16 %v324, %v323
  %v357 = vpack.c.b16 %v326, %v325
  %v358 = vpack.c.b16 %v328, %v327
  %v359 = vpack.c.b16 %v330, %v329
  %v360 = vpack.c.b16 %v332, %v331
  %v361 = vpack.c.b16 %v334, %v333
  %v362 = vpack.c.b16 %v336, %v335
  %v363 = vpack.c.b16 %v338, %v337
  %v364 = vpack.c.b16 %v340, %v339
  %389 = vmatprep.subr.bf16.mxu0 0
  %390 = vmatpush1.bf16.msra.mxu0 %v348
  %391 = vmatprep.subr.bf16.mxu0 0
  %392 = vmatpush1.bf16.msra.mxu0 %v347
  %393 = vmatprep.subr.bf16.mxu0 0
  %394 = vmatpush1.bf16.msra.mxu0 %v346
  %395 = vmatprep.subr.bf16.mxu0 0
  %396 = vmatpush1.bf16.msra.mxu0 %v345
  %397 = vmatprep.subr.bf16.mxu0 0
  %398 = vmatpush1.bf16.msra.mxu0 %v344
  %399 = vmatprep.subr.bf16.mxu0 0
  %400 = vmatpush1.bf16.msra.mxu0 %v343
  %401 = vmatprep.subr.bf16.mxu0 0
  %402 = vmatpush1.bf16.msra.mxu0 %v342
  %403 = vmatprep.subr.bf16.mxu0 0
  %404 = vmatpush1.bf16.msra.mxu0 %v341
  %405 = vmatprep.subr.bf16.mxu0 0
  %406 = vmatpush2.bf16.msra.mxu0 %v356
  %407 = vmatprep.subr.bf16.mxu0 0
  %408 = vmatpush2.bf16.msra.mxu0 %v355
  %409 = vmatprep.subr.bf16.mxu0 0
  %410 = vmatpush2.bf16.msra.mxu0 %v354
  %411 = vmatprep.subr.bf16.mxu0 0
  %412 = vmatpush2.bf16.msra.mxu0 %v353
  %413 = vmatprep.subr.bf16.mxu0 0
  %414 = vmatpush2.bf16.msra.mxu0 %v352
  %415 = vmatprep.subr.bf16.mxu0 0
  %416 = vmatpush2.bf16.msra.mxu0 %v351
  %417 = vmatprep.subr.bf16.mxu0 0
  %418 = vmatpush2.bf16.msra.mxu0 %v350
  %419 = vmatprep.subr.bf16.mxu0 0
  %420 = vmatpush2.bf16.msra.mxu0 %v349
  %421 = vmatprep.mubr.bf16.mxu0 %v192
  %422 = vmatmul.mubr.bf16.gmra.mxu0 %v191
  %v423 = vpop.f32.mrf.mxu0
  %v424 = vadd.f32 0.0, %v423
  %v425 = vpop.f32.mrf.mxu0
  %v426 = vpop.f32.mrf.mxu0
  %v427 = vadd.f32 0.0, %v426
  %v428 = vpop.f32.mrf.mxu0
  %429 = vmatprep.mubr.bf16.mxu0 %v195
  %430 = vmatmul.mubr.bf16.gmra.mxu0 %v194
  %v431 = vpop.f32.mrf.mxu0
  %v432 = vadd.f32 0.0, %v431
  %v433 = vpop.f32.mrf.mxu0
  %v434 = vpop.f32.mrf.mxu0
  %v435 = vadd.f32 0.0, %v434
  %v436 = vpop.f32.mrf.mxu0
  %437 = vdwg.mxu0
  %438 = vmatprep.subr.bf16.mxu0 0
  %439 = vmatpush1.bf16.msra.mxu0 %v364
  %440 = vmatprep.subr.bf16.mxu0 0
  %441 = vmatpush1.bf16.msra.mxu0 %v363
  %442 = vmatprep.subr.bf16.mxu0 0
  %443 = vmatpush1.bf16.msra.mxu0 %v362
  %444 = vmatprep.subr.bf16.mxu0 0
  %445 = vmatpush1.bf16.msra.mxu0 %v361
  %446 = vmatprep.subr.bf16.mxu0 0
  %447 = vmatpush1.bf16.msra.mxu0 %v360
  %448 = vmatprep.subr.bf16.mxu0 0
  %449 = vmatpush1.bf16.msra.mxu0 %v359
  %450 = vmatprep.subr.bf16.mxu0 0
  %451 = vmatpush1.bf16.msra.mxu0 %v358
  %452 = vmatprep.subr.bf16.mxu0 0
  %453 = vmatpush1.bf16.msra.mxu0 %v357
  %454 = vmatprep.subr.bf16.mxu0 0
  %455 = vmatpush2.bf16.msra.mxu0 0
  %456 = vmatprep.subr.bf16.mxu0 0
  %457 = vmatpush2.bf16.msra.mxu0 0
  %458 = vmatprep.subr.bf16.mxu0 0
  %459 = vmatpush2.bf16.msra.mxu0 0
  %460 = vmatprep.subr.bf16.mxu0 0
  %461 = vmatpush2.bf16.msra.mxu0 0
  %462 = vmatprep.subr.bf16.mxu0 0
  %463 = vmatpush2.bf16.msra.mxu0 0
  %464 = vmatprep.subr.bf16.mxu0 0
  %465 = vmatpush2.bf16.msra.mxu0 0
  %466 = vmatprep.subr.bf16.mxu0 0
  %467 = vmatpush2.bf16.msra.mxu0 0
  %468 = vmatprep.subr.bf16.mxu0 0
  %469 = vmatpush2.bf16.msra.mxu0 0
  %470 = vmatprep.mubr.bf16.mxu0 0
  %471 = vmatmul.mubr.bf16.gmra.mxu0 %v193
  %v472 = vpop.f32.mrf.mxu0
  %v473 = vadd.f32 %v424, %v472
  %v474 = vpop.f32.mrf.mxu0
  %v475 = vpop.f32.mrf.mxu0
  %v476 = vadd.f32 %v427, %v475
  %v477 = vpop.f32.mrf.mxu0
  %478 = vmatprep.mubr.bf16.mxu0 0
  %479 = vmatmul.mubr.bf16.gmra.mxu0 %v196
  %v480 = vpop.f32.mrf.mxu0
  %v481 = vadd.f32 %v432, %v480
  %v482 = vpop.f32.mrf.mxu0
  %v483 = vpop.f32.mrf.mxu0
  %v484 = vadd.f32 %v435, %v483
  %v485 = vpop.f32.mrf.mxu0
  %486 = vdwg.mxu0
  %v487 = vadd.f32 %v473, %v476
  %v488 = vadd.f32 %v487, %v481
  %v489 = vadd.f32 %v488, %v484
  %v490 = vrot.slane %v489, 4
  %v491 = vadd.f32 %v489, %v490
  %v492 = vrot.slane %v491, 2
  %v493 = vadd.f32 %v491, %v492
  %v494 = vrot.slane %v493, 1
  %v495 = vadd.f32 %v493, %v494
  %496 = vmatprep.subr.mxu0 0.0
  %497 = vmatpush1.msra.mxu0 %v52
  %498 = vmatprep.subr.mxu0 0.0
  %499 = vmatpush1.msra.mxu0 %v51
  %500 = vmatprep.subr.mxu0 0.0
  %501 = vmatpush1.msra.mxu0 %v50
  %502 = vmatprep.subr.mxu0 0.0
  %503 = vmatpush1.msra.mxu0 %v49
  %504 = vmatprep.subr.mxu0 0.0
  %505 = vmatpush1.msra.mxu0 %v48
  %506 = vmatprep.subr.mxu0 0.0
  %507 = vmatpush1.msra.mxu0 %v47
  %508 = vmatprep.subr.mxu0 0.0
  %509 = vmatpush1.msra.mxu0 %v46
  %510 = vmatprep.subr.mxu0 0.0
  %511 = vmatpush1.msra.mxu0 %v45
  %512 = vmatprep.subr.mxu0 0.0
  %513 = vmatpush1.msra.mxu0 %v44
  %514 = vmatprep.subr.mxu0 0.0
  %515 = vmatpush1.msra.mxu0 %v43
  %516 = vmatprep.subr.mxu0 0.0
  %517 = vmatpush1.msra.mxu0 %v42
  %518 = vmatprep.subr.mxu0 0.0
  %519 = vmatpush1.msra.mxu0 %v41
  %520 = vmatprep.subr.mxu0 0.0
  %521 = vmatpush1.msra.mxu0 %v40
  %522 = vmatprep.subr.mxu0 0.0
  %523 = vmatpush1.msra.mxu0 %v39
  %524 = vmatprep.subr.mxu0 0.0
  %525 = vmatpush1.msra.mxu0 %v38
  %526 = vmatprep.subr.mxu0 0.0
  %527 = vmatpush1.msra.mxu0 %v37
  %528 = vmatprep.subr.mxu0 0.0
  %529 = vmatpush2.msra.mxu0 0.0
  %530 = vmatprep.subr.mxu0 0.0
  %531 = vmatpush2.msra.mxu0 0.0
  %532 = vmatprep.subr.mxu0 0.0
  %533 = vmatpush2.msra.mxu0 0.0
  %534 = vmatprep.subr.mxu0 0.0
  %535 = vmatpush2.msra.mxu0 0.0
  %536 = vmatprep.subr.mxu0 0.0
  %537 = vmatpush2.msra.mxu0 0.0
  %538 = vmatprep.subr.mxu0 0.0
  %539 = vmatpush2.msra.mxu0 0.0
  %540 = vmatprep.subr.mxu0 0.0
  %541 = vmatpush2.msra.mxu0 0.0
  %542 = vmatprep.subr.mxu0 0.0
  %543 = vmatpush2.msra.mxu0 0.0
  %544 = vmatprep.subr.mxu0 0.0
  %545 = vmatpush2.msra.mxu0 0.0
  %546 = vmatprep.subr.mxu0 0.0
  %547 = vmatpush2.msra.mxu0 0.0
  %548 = vmatprep.subr.mxu0 0.0
  %549 = vmatpush2.msra.mxu0 0.0
  %550 = vmatprep.subr.mxu0 0.0
  %551 = vmatpush2.msra.mxu0 0.0
  %552 = vmatprep.subr.mxu0 0.0
  %553 = vmatpush2.msra.mxu0 0.0
  %554 = vmatprep.subr.mxu0 0.0
  %555 = vmatpush2.msra.mxu0 0.0
  %556 = vmatprep.subr.mxu0 0.0
  %557 = vmatpush2.msra.mxu0 0.0
  %558 = vmatprep.subr.mxu0 0.0
  %559 = vmatpush2.msra.mxu0 0.0
  %560 = vmatprep.mubr.f32.mxu0 0.0
  %561 = vmatmul.mubr.f32.gmra.mxu0 %v495
  %v562 = vpop.f32.mrf.mxu0
  %v563 = vadd.f32 0.0, %v562
  %v564 = vpop.f32.mrf.mxu0
  %565 = vdwg.mxu0
  %v566 = vlaneseq
  %v567 = vshrl.u32 %v566, 7
  %v568 = vsub.s32 0, %v567
  %v569 = vrot.slane %v563, %v568
  %v570 = vsub.f32 %v473, %v569
  %v571 = vsub.f32 %v476, %v569
  %v572 = vsub.f32 %v481, %v569
  %v573 = vsub.f32 %v484, %v569
  %v574 = vmul.f32 %v570, %v570
  %v575 = vmul.f32 %v571, %v571
  %v576 = vmul.f32 %v572, %v572
  %v577 = vmul.f32 %v573, %v573
  %v578 = vadd.f32 %v574, %v575
  %v579 = vadd.f32 %v578, %v576
  %v580 = vadd.f32 %v579, %v577
  %v581 = vrot.slane %v580, 4
  %v582 = vadd.f32 %v580, %v581
  %v583 = vrot.slane %v582, 2
  %v584 = vadd.f32 %v582, %v583
  %v585 = vrot.slane %v584, 1
  %v586 = vadd.f32 %v584, %v585
  %587 = vmatprep.subr.mxu0 0.0
  %588 = vmatpush1.msra.mxu0 %v52
  %589 = vmatprep.subr.mxu0 0.0
  %590 = vmatpush1.msra.mxu0 %v51
  %591 = vmatprep.subr.mxu0 0.0
  %592 = vmatpush1.msra.mxu0 %v50
  %593 = vmatprep.subr.mxu0 0.0
  %594 = vmatpush1.msra.mxu0 %v49
  %595 = vmatprep.subr.mxu0 0.0
  %596 = vmatpush1.msra.mxu0 %v48
  %597 = vmatprep.subr.mxu0 0.0
  %598 = vmatpush1.msra.mxu0 %v47
  %599 = vmatprep.subr.mxu0 0.0
  %600 = vmatpush1.msra.mxu0 %v46
  %601 = vmatprep.subr.mxu0 0.0
  %602 = vmatpush1.msra.mxu0 %v45
  %603 = vmatprep.subr.mxu0 0.0
  %604 = vmatpush1.msra.mxu0 %v44
  %605 = vmatprep.subr.mxu0 0.0
  %606 = vmatpush1.msra.mxu0 %v43
  %607 = vmatprep.subr.mxu0 0.0
  %608 = vmatpush1.msra.mxu0 %v42
  %609 = vmatprep.subr.mxu0 0.0
  %610 = vmatpush1.msra.mxu0 %v41
  %611 = vmatprep.subr.mxu0 0.0
  %612 = vmatpush1.msra.mxu0 %v40
  %613 = vmatprep.subr.mxu0 0.0
  %614 = vmatpush1.msra.mxu0 %v39
  %615 = vmatprep.subr.mxu0 0.0
  %616 = vmatpush1.msra.mxu0 %v38
  %617 = vmatprep.subr.mxu0 0.0
  %618 = vmatpush1.msra.mxu0 %v37
  %619 = vmatprep.subr.mxu0 0.0
  %620 = vmatpush2.msra.mxu0 0.0
  %621 = vmatprep.subr.mxu0 0.0
  %622 = vmatpush2.msra.mxu0 0.0
  %623 = vmatprep.subr.mxu0 0.0
  %624 = vmatpush2.msra.mxu0 0.0
  %625 = vmatprep.subr.mxu0 0.0
  %626 = vmatpush2.msra.mxu0 0.0
  %627 = vmatprep.subr.mxu0 0.0
  %628 = vmatpush2.msra.mxu0 0.0
  %629 = vmatprep.subr.mxu0 0.0
  %630 = vmatpush2.msra.mxu0 0.0
  %631 = vmatprep.subr.mxu0 0.0
  %632 = vmatpush2.msra.mxu0 0.0
  %633 = vmatprep.subr.mxu0 0.0
  %634 = vmatpush2.msra.mxu0 0.0
  %635 = vmatprep.subr.mxu0 0.0
  %636 = vmatpush2.msra.mxu0 0.0
  %637 = vmatprep.subr.mxu0 0.0
  %638 = vmatpush2.msra.mxu0 0.0
  %639 = vmatprep.subr.mxu0 0.0
  %640 = vmatpush2.msra.mxu0 0.0
  %641 = vmatprep.subr.mxu0 0.0
  %642 = vmatpush2.msra.mxu0 0.0
  %643 = vmatprep.subr.mxu0 0.0
  %644 = vmatpush2.msra.mxu0 0.0
  %645 = vmatprep.subr.mxu0 0.0
  %646 = vmatpush2.msra.mxu0 0.0
  %647 = vmatprep.subr.mxu0 0.0
  %648 = vmatpush2.msra.mxu0 0.0
  %649 = vmatprep.subr.mxu0 0.0
  %650 = vmatpush2.msra.mxu0 0.0
  %651 = vmatprep.mubr.f32.mxu0 0.0
  %652 = vmatmul.mubr.f32.gmra.mxu0 %v586
  %v653 = vpop.f32.mrf.mxu0
  %v654 = vadd.f32 1e-05, %v653
  %v655 = vpop.f32.mrf.mxu0
  %656 = vdwg.mxu0
  %v657 = vrsqrt.pop %v654
  %v658 = vld [vmem:[%s2] sm:$0x1]
  %v659 = vmul.f32 %v658, %v657
  %v661 = vlaneseq
  %v662 = vshrl.u32 %v661, 7
  %v663 = vsub.s32 0, %v662
  %v664 = vrot.slane %v659, %v663
  %v666 = vmul.f32 %v570, %v664
  %v667 = vmul.f32 %v571, %v664
  %v668 = vmul.f32 %v572, %v664
  %v669 = vmul.f32 %v573, %v664
  %v670 = vld [vmem:[%s3] sm:$0x1]
  %v672 = vlaneseq
  %v673 = vshrl.u32 %v672, 7
  %v674 = vsub.s32 0, %v673
  %v675 = vrot.slane %v670, %v674
  %v677 = vadd.f32 %v666, %v675
  %v678 = vadd.f32 %v667, %v675
  %v679 = vadd.f32 %v668, %v675
  %v680 = vadd.f32 %v669, %v675
  %v681 = vmax.f32 %v677, 0.0
  %v682 = vmax.f32 %v678, 0.0
  %v683 = vmax.f32 %v679, 0.0
  %v684 = vmax.f32 %v680, 0.0
  %685 = vmatprep.subr.mxu0 0.0
  %686 = vmatpush1.msra.mxu0 0.0
  %687 = vmatprep.subr.mxu0 0.0
  %688 = vmatpush1.msra.mxu0 0.0
  %689 = vmatprep.subr.mxu0 0.0
  %690 = vmatpush1.msra.mxu0 0.0
  %691 = vmatprep.subr.mxu0 0.0
  %692 = vmatpush1.msra.mxu0 0.0
  %693 = vmatprep.subr.mxu0 0.0
  %694 = vmatpush1.msra.mxu0 0.0
  %695 = vmatprep.subr.mxu0 0.0
  %696 = vmatpush1.msra.mxu0 0.0
  %697 = vmatprep.subr.mxu0 0.0
  %698 = vmatpush1.msra.mxu0 0.0
  %699 = vmatprep.subr.mxu0 0.0
  %700 = vmatpush1.msra.mxu0 0.0
  %701 = vmatprep.subr.mxu0 0.0
  %702 = vmatpush1.msra.mxu0 0.0
  %703 = vmatprep.subr.mxu0 0.0
  %704 = vmatpush1.msra.mxu0 0.0
  %705 = vmatprep.subr.mxu0 0.0
  %706 = vmatpush1.msra.mxu0 0.0
  %707 = vmatprep.subr.mxu0 0.0
  %708 = vmatpush1.msra.mxu0 0.0
  %709 = vmatprep.subr.mxu0 0.0
  %710 = vmatpush1.msra.mxu0 %v684
  %711 = vmatprep.subr.mxu0 0.0
  %712 = vmatpush1.msra.mxu0 %v683
  %713 = vmatprep.subr.mxu0 0.0
  %714 = vmatpush1.msra.mxu0 %v682
  %715 = vmatprep.subr.mxu0 0.0
  %716 = vmatpush1.msra.mxu0 %v681
  %717 = vmatprep.subr.mxu0 0.0
  %718 = vmatpush2.msra.mxu0 0.0
  %719 = vmatprep.subr.mxu0 0.0
  %720 = vmatpush2.msra.mxu0 0.0
  %721 = vmatprep.subr.mxu0 0.0
  %722 = vmatpush2.msra.mxu0 0.0
  %723 = vmatprep.subr.mxu0 0.0
  %724 = vmatpush2.msra.mxu0 0.0
  %725 = vmatprep.subr.mxu0 0.0
  %726 = vmatpush2.msra.mxu0 0.0
  %727 = vmatprep.subr.mxu0 0.0
  %728 = vmatpush2.msra.mxu0 0.0
  %729 = vmatprep.subr.mxu0 0.0
  %730 = vmatpush2.msra.mxu0 0.0
  %731 = vmatprep.subr.mxu0 0.0
  %732 = vmatpush2.msra.mxu0 0.0
  %733 = vmatprep.subr.mxu0 0.0
  %734 = vmatpush2.msra.mxu0 0.0
  %735 = vmatprep.subr.mxu0 0.0
  %736 = vmatpush2.msra.mxu0 0.0
  %737 = vmatprep.subr.mxu0 0.0
  %738 = vmatpush2.msra.mxu0 0.0
  %739 = vmatprep.subr.mxu0 0.0
  %740 = vmatpush2.msra.mxu0 0.0
  %741 = vmatprep.subr.mxu0 0.0
  %742 = vmatpush2.msra.mxu0 0.0
  %743 = vmatprep.subr.mxu0 0.0
  %744 = vmatpush2.msra.mxu0 0.0
  %745 = vmatprep.subr.mxu0 0.0
  %746 = vmatpush2.msra.mxu0 0.0
  %747 = vmatprep.subr.mxu0 0.0
  %748 = vmatpush2.msra.mxu0 0.0
  %749 = vmatprep.mubr.f32.mxu0 0.0
  %750 = vmatmul.mubr.f32.gmra.mxu0 %v63
  %v751 = vpop.f32.mrf.mxu0
  %v752 = vadd.f32 0.0, %v751
  %v753 = vpop.f32.mrf.mxu0
  %754 = vmatprep.mubr.f32.mxu0 0.0
  %755 = vmatmul.mubr.f32.gmra.mxu0 %v66
  %v756 = vpop.f32.mrf.mxu0
  %v757 = vadd.f32 0.0, %v756
  %v758 = vpop.f32.mrf.mxu0
  %759 = vmatprep.mubr.f32.mxu0 0.0
  %760 = vmatmul.mubr.f32.gmra.mxu0 %v69
  %v761 = vpop.f32.mrf.mxu0
  %v762 = vadd.f32 0.0, %v761
  %v763 = vpop.f32.mrf.mxu0
  %764 = vmatprep.mubr.f32.mxu0 0.0
  %765 = vmatmul.mubr.f32.gmra.mxu0 %v72
  %v766 = vpop.f32.mrf.mxu0
  %v767 = vadd.f32 0.0, %v766
  %v768 = vpop.f32.mrf.mxu0
  %769 = vmatprep.mubr.f32.mxu0 0.0
  %770 = vmatmul.mubr.f32.gmra.mxu0 %v75
  %v771 = vpop.f32.mrf.mxu0
  %v772 = vadd.f32 0.0, %v771
  %v773 = vpop.f32.mrf.mxu0
  %774 = vmatprep.mubr.f32.mxu0 0.0
  %775 = vmatmul.mubr.f32.gmra.mxu0 %v78
  %v776 = vpop.f32.mrf.mxu0
  %v777 = vadd.f32 0.0, %v776
  %v778 = vpop.f32.mrf.mxu0
  %779 = vmatprep.mubr.f32.mxu0 0.0
  %780 = vmatmul.mubr.f32.gmra.mxu0 %v81
  %v781 = vpop.f32.mrf.mxu0
  %v782 = vadd.f32 0.0, %v781
  %v783 = vpop.f32.mrf.mxu0
  %784 = vmatprep.mubr.f32.mxu0 0.0
  %785 = vmatmul.mubr.f32.gmra.mxu0 %v84
  %v786 = vpop.f32.mrf.mxu0
  %v787 = vadd.f32 0.0, %v786
  %v788 = vpop.f32.mrf.mxu0
  %789 = vdwg.mxu0
  %v790 = vpack.c.bf16 %v757, %v752
  %v791 = vpack.c.bf16 %v682, %v681
  %v792 = vpack.c.bf16 %v777, %v772
  %v793 = vpack.c.bf16 %v767, %v762
  %v794 = vpack.c.bf16 %v684, %v683
  %v795 = vpack.c.bf16 %v787, %v782
  %v796 = vld [vmem:[%s4] sm:$0xf]
  %v797 = vld [vmem:[%s4 + $0x4] sm:$0xf]
  %v798 = vld [vmem:[%s4 + $0x8] sm:$0xf]
  %v799 = vld [vmem:[%s4 + $0xc] sm:$0xf]
  %v800 = vld [vmem:[%s4 + $0x10] sm:$0xf]
  %v801 = vld [vmem:[%s4 + $0x14] sm:$0xf]
  %v802 = vld [vmem:[%s4 + $0x18] sm:$0xf]
  %v803 = vld [vmem:[%s4 + $0x1c] sm:$0xf]
  %v804 = vld [vmem:[%s4 + $0x20] sm:$0xf]
  %v805 = vld [vmem:[%s4 + $0x24] sm:$0xf]
  %v806 = vld [vmem:[%s4 + $0x28] sm:$0xf]
  %v807 = vld [vmem:[%s4 + $0x2c] sm:$0xf]
  %v808 = vld [vmem:[%s4 + $0x30] sm:$0xf]
  %v809 = vld [vmem:[%s4 + $0x34] sm:$0xf]
  %v810 = vld [vmem:[%s4 + $0x38] sm:$0xf]
  %v811 = vld [vmem:[%s4 + $0x3c] sm:$0xf]
  %v812 = vld [vmem:[%s4 + $0x40] sm:$0xf]
  %v813 = vld [vmem:[%s4 + $0x44] sm:$0xf]
  %v814 = vld [vmem:[%s4 + $0x48] sm:$0xf]
  %v815 = vld [vmem:[%s4 + $0x4c] sm:$0xf]
  %v816 = vld [vmem:[%s4 + $0x50] sm:$0xf]
  %v817 = vld [vmem:[%s4 + $0x54] sm:$0xf]
  %v818 = vld [vmem:[%s4 + $0x58] sm:$0xf]
  %v819 = vld [vmem:[%s4 + $0x5c] sm:$0xf]
  %v820 = vld [vmem:[%s4 + $0x60] sm:$0xf]
  %v821 = vld [vmem:[%s4 + $0x64] sm:$0xf]
  %v822 = vld [vmem:[%s4 + $0x68] sm:$0xf]
  %v823 = vld [vmem:[%s4 + $0x6c] sm:$0xf]
  %v824 = vld [vmem:[%s4 + $0x70] sm:$0xf]
  %v825 = vld [vmem:[%s4 + $0x74] sm:$0xf]
  %v826 = vld [vmem:[%s4 + $0x78] sm:$0xf]
  %v827 = vld [vmem:[%s4 + $0x7c] sm:$0xf]
  %v828 = vld [vmem:[%s4 + $0x80] sm:$0xf]
  %v829 = vld [vmem:[%s4 + $0x84] sm:$0xf]
  %v830 = vld [vmem:[%s4 + $0x88] sm:$0xf]
  %v831 = vld [vmem:[%s4 + $0x8c] sm:$0xf]
  %v832 = vld [vmem:[%s4 + $0x90] sm:$0xf]
  %v833 = vld [vmem:[%s4 + $0x94] sm:$0xf]
  %v834 = vld [vmem:[%s4 + $0x98] sm:$0xf]
  %v835 = vld [vmem:[%s4 + $0x9c] sm:$0xf]
  %v836 = vld [vmem:[%s4 + $0xa0] sm:$0xf]
  %v837 = vld [vmem:[%s4 + $0xa4] sm:$0xf]
  %v838 = vld [vmem:[%s4 + $0xa8] sm:$0xf]
  %v839 = vld [vmem:[%s4 + $0xac] sm:$0xf]
  %v840 = vld [vmem:[%s4 + $0xb0] sm:$0xf]
  %v841 = vld [vmem:[%s4 + $0xb4] sm:$0xf]
  %v842 = vld [vmem:[%s4 + $0xb8] sm:$0xf]
  %v843 = vld [vmem:[%s4 + $0xbc] sm:$0xf]
  %v892 = vunpack.c.l.b16 %v796
  %v893 = vunpack.c.l.b16 %v797
  %v894 = vunpack.c.l.b16 %v798
  %v895 = vunpack.c.l.b16 %v799
  %v896 = vunpack.c.l.b16 %v800
  %v897 = vunpack.c.l.b16 %v801
  %v898 = vunpack.c.l.b16 %v802
  %v899 = vunpack.c.l.b16 %v803
  %v900 = vunpack.c.l.b16 %v804
  %v901 = vunpack.c.l.b16 %v805
  %v902 = vunpack.c.l.b16 %v806
  %v903 = vunpack.c.l.b16 %v807
  %v904 = vunpack.c.l.b16 %v808
  %v905 = vunpack.c.l.b16 %v809
  %v906 = vunpack.c.l.b16 %v810
  %v907 = vunpack.c.l.b16 %v811
  %v908 = vunpack.c.l.b16 %v812
  %v909 = vunpack.c.l.b16 %v813
  %v910 = vunpack.c.l.b16 %v814
  %v911 = vunpack.c.l.b16 %v815
  %v912 = vunpack.c.l.b16 %v816
  %v913 = vunpack.c.l.b16 %v817
  %v914 = vunpack.c.l.b16 %v818
  %v915 = vunpack.c.l.b16 %v819
  %v916 = vunpack.c.l.b16 %v820
  %v917 = vunpack.c.l.b16 %v821
  %v918 = vunpack.c.l.b16 %v822
  %v919 = vunpack.c.l.b16 %v823
  %v920 = vunpack.c.l.b16 %v824
  %v921 = vunpack.c.l.b16 %v825
  %v922 = vunpack.c.l.b16 %v826
  %v923 = vunpack.c.l.b16 %v827
  %v924 = vunpack.c.l.b16 %v828
  %v925 = vunpack.c.l.b16 %v829
  %v926 = vunpack.c.l.b16 %v830
  %v927 = vunpack.c.l.b16 %v831
  %v928 = vunpack.c.l.b16 %v832
  %v929 = vunpack.c.l.b16 %v833
  %v930 = vunpack.c.l.b16 %v834
  %v931 = vunpack.c.l.b16 %v835
  %v932 = vunpack.c.l.b16 %v836
  %v933 = vunpack.c.l.b16 %v837
  %v934 = vunpack.c.l.b16 %v838
  %v935 = vunpack.c.l.b16 %v839
  %v936 = vunpack.c.l.b16 %v840
  %v937 = vunpack.c.l.b16 %v841
  %v938 = vunpack.c.l.b16 %v842
  %v939 = vunpack.c.l.b16 %v843
  %v940 = vpack.c.b16 %v893, %v892
  %v941 = vpack.c.b16 %v895, %v894
  %v942 = vpack.c.b16 %v897, %v896
  %v943 = vpack.c.b16 %v899, %v898
  %v944 = vpack.c.b16 %v901, %v900
  %v945 = vpack.c.b16 %v903, %v902
  %v946 = vpack.c.b16 %v905, %v904
  %v947 = vpack.c.b16 %v907, %v906
  %v948 = vpack.c.b16 %v909, %v908
  %v949 = vpack.c.b16 %v911, %v910
  %v950 = vpack.c.b16 %v913, %v912
  %v951 = vpack.c.b16 %v915, %v914
  %v952 = vpack.c.b16 %v917, %v916
  %v953 = vpack.c.b16 %v919, %v918
  %v954 = vpack.c.b16 %v921, %v920
  %v955 = vpack.c.b16 %v923, %v922
  %v956 = vpack.c.b16 %v925, %v924
  %v957 = vpack.c.b16 %v927, %v926
  %v958 = vpack.c.b16 %v929, %v928
  %v959 = vpack.c.b16 %v931, %v930
  %v960 = vpack.c.b16 %v933, %v932
  %v961 = vpack.c.b16 %v935, %v934
  %v962 = vpack.c.b16 %v937, %v936
  %v963 = vpack.c.b16 %v939, %v938
  %988 = vmatprep.subr.bf16.mxu0 0
  %989 = vmatpush1.bf16.msra.mxu0 %v947
  %990 = vmatprep.subr.bf16.mxu0 0
  %991 = vmatpush1.bf16.msra.mxu0 %v946
  %992 = vmatprep.subr.bf16.mxu0 0
  %993 = vmatpush1.bf16.msra.mxu0 %v945
  %994 = vmatprep.subr.bf16.mxu0 0
  %995 = vmatpush1.bf16.msra.mxu0 %v944
  %996 = vmatprep.subr.bf16.mxu0 0
  %997 = vmatpush1.bf16.msra.mxu0 %v943
  %998 = vmatprep.subr.bf16.mxu0 0
  %999 = vmatpush1.bf16.msra.mxu0 %v942
  %1000 = vmatprep.subr.bf16.mxu0 0
  %1001 = vmatpush1.bf16.msra.mxu0 %v941
  %1002 = vmatprep.subr.bf16.mxu0 0
  %1003 = vmatpush1.bf16.msra.mxu0 %v940
  %1004 = vmatprep.subr.bf16.mxu0 0
  %1005 = vmatpush2.bf16.msra.mxu0 %v955
  %1006 = vmatprep.subr.bf16.mxu0 0
  %1007 = vmatpush2.bf16.msra.mxu0 %v954
  %1008 = vmatprep.subr.bf16.mxu0 0
  %1009 = vmatpush2.bf16.msra.mxu0 %v953
  %1010 = vmatprep.subr.bf16.mxu0 0
  %1011 = vmatpush2.bf16.msra.mxu0 %v952
  %1012 = vmatprep.subr.bf16.mxu0 0
  %1013 = vmatpush2.bf16.msra.mxu0 %v951
  %1014 = vmatprep.subr.bf16.mxu0 0
  %1015 = vmatpush2.bf16.msra.mxu0 %v950
  %1016 = vmatprep.subr.bf16.mxu0 0
  %1017 = vmatpush2.bf16.msra.mxu0 %v949
  %1018 = vmatprep.subr.bf16.mxu0 0
  %1019 = vmatpush2.bf16.msra.mxu0 %v948
  %1020 = vmatprep.mubr.bf16.mxu0 %v791
  %1021 = vmatmul.mubr.bf16.gmra.mxu0 %v790
  %v1022 = vpop.f32.mrf.mxu0
  %v1023 = vadd.f32 0.0, %v1022
  %v1024 = vpop.f32.mrf.mxu0
  %v1025 = vpop.f32.mrf.mxu0
  %v1026 = vadd.f32 0.0, %v1025
  %v1027 = vpop.f32.mrf.mxu0
  %1028 = vmatprep.mubr.bf16.mxu0 %v794
  %1029 = vmatmul.mubr.bf16.gmra.mxu0 %v793
  %v1030 = vpop.f32.mrf.mxu0
  %v1031 = vadd.f32 0.0, %v1030
  %v1032 = vpop.f32.mrf.mxu0
  %v1033 = vpop.f32.mrf.mxu0
  %v1034 = vadd.f32 0.0, %v1033
  %v1035 = vpop.f32.mrf.mxu0
  %1036 = vdwg.mxu0
  %1037 = vmatprep.subr.bf16.mxu0 0
  %1038 = vmatpush1.bf16.msra.mxu0 %v963
  %1039 = vmatprep.subr.bf16.mxu0 0
  %1040 = vmatpush1.bf16.msra.mxu0 %v962
  %1041 = vmatprep.subr.bf16.mxu0 0
  %1042 = vmatpush1.bf16.msra.mxu0 %v961
  %1043 = vmatprep.subr.bf16.mxu0 0
  %1044 = vmatpush1.bf16.msra.mxu0 %v960
  %1045 = vmatprep.subr.bf16.mxu0 0
  %1046 = vmatpush1.bf16.msra.mxu0 %v959
  %1047 = vmatprep.subr.bf16.mxu0 0
  %1048 = vmatpush1.bf16.msra.mxu0 %v958
  %1049 = vmatprep.subr.bf16.mxu0 0
  %1050 = vmatpush1.bf16.msra.mxu0 %v957
  %1051 = vmatprep.subr.bf16.mxu0 0
  %1052 = vmatpush1.bf16.msra.mxu0 %v956
  %1053 = vmatprep.subr.bf16.mxu0 0
  %1054 = vmatpush2.bf16.msra.mxu0 0
  %1055 = vmatprep.subr.bf16.mxu0 0
  %1056 = vmatpush2.bf16.msra.mxu0 0
  %1057 = vmatprep.subr.bf16.mxu0 0
  %1058 = vmatpush2.bf16.msra.mxu0 0
  %1059 = vmatprep.subr.bf16.mxu0 0
  %1060 = vmatpush2.bf16.msra.mxu0 0
  %1061 = vmatprep.subr.bf16.mxu0 0
  %1062 = vmatpush2.bf16.msra.mxu0 0
  %1063 = vmatprep.subr.bf16.mxu0 0
  %1064 = vmatpush2.bf16.msra.mxu0 0
  %1065 = vmatprep.subr.bf16.mxu0 0
  %1066 = vmatpush2.bf16.msra.mxu0 0
  %1067 = vmatprep.subr.bf16.mxu0 0
  %1068 = vmatpush2.bf16.msra.mxu0 0
  %1069 = vmatprep.mubr.bf16.mxu0 0
  %1070 = vmatmul.mubr.bf16.gmra.mxu0 %v792
  %v1071 = vpop.f32.mrf.mxu0
  %v1072 = vadd.f32 %v1023, %v1071
  %v1073 = vpop.f32.mrf.mxu0
  %v1074 = vpop.f32.mrf.mxu0
  %v1075 = vadd.f32 %v1026, %v1074
  %v1076 = vpop.f32.mrf.mxu0
  %1077 = vmatprep.mubr.bf16.mxu0 0
  %1078 = vmatmul.mubr.bf16.gmra.mxu0 %v795
  %v1079 = vpop.f32.mrf.mxu0
  %v1080 = vadd.f32 %v1031, %v1079
  %v1081 = vpop.f32.mrf.mxu0
  %v1082 = vpop.f32.mrf.mxu0
  %v1083 = vadd.f32 %v1034, %v1082
  %v1084 = vpop.f32.mrf.mxu0
  %1085 = vdwg.mxu0
  %v1086 = vadd.f32 %v1072, %v1075
  %v1087 = vadd.f32 %v1086, %v1080
  %v1088 = vadd.f32 %v1087, %v1083
  %v1089 = vrot.slane %v1088, 4
  %v1090 = vadd.f32 %v1088, %v1089
  %v1091 = vrot.slane %v1090, 2
  %v1092 = vadd.f32 %v1090, %v1091
  %v1093 = vrot.slane %v1092, 1
  %v1094 = vadd.f32 %v1092, %v1093
  %1095 = vmatprep.subr.mxu0 0.0
  %1096 = vmatpush1.msra.mxu0 %v52
  %1097 = vmatprep.subr.mxu0 0.0
  %1098 = vmatpush1.msra.mxu0 %v51
  %1099 = vmatprep.subr.mxu0 0.0
  %1100 = vmatpush1.msra.mxu0 %v50
  %1101 = vmatprep.subr.mxu0 0.0
  %1102 = vmatpush1.msra.mxu0 %v49
  %1103 = vmatprep.subr.mxu0 0.0
  %1104 = vmatpush1.msra.mxu0 %v48
  %1105 = vmatprep.subr.mxu0 0.0
  %1106 = vmatpush1.msra.mxu0 %v47
  %1107 = vmatprep.subr.mxu0 0.0
  %1108 = vmatpush1.msra.mxu0 %v46
  %1109 = vmatprep.subr.mxu0 0.0
  %1110 = vmatpush1.msra.mxu0 %v45
  %1111 = vmatprep.subr.mxu0 0.0
  %1112 = vmatpush1.msra.mxu0 %v44
  %1113 = vmatprep.subr.mxu0 0.0
  %1114 = vmatpush1.msra.mxu0 %v43
  %1115 = vmatprep.subr.mxu0 0.0
  %1116 = vmatpush1.msra.mxu0 %v42
  %1117 = vmatprep.subr.mxu0 0.0
  %1118 = vmatpush1.msra.mxu0 %v41
  %1119 = vmatprep.subr.mxu0 0.0
  %1120 = vmatpush1.msra.mxu0 %v40
  %1121 = vmatprep.subr.mxu0 0.0
  %1122 = vmatpush1.msra.mxu0 %v39
  %1123 = vmatprep.subr.mxu0 0.0
  %1124 = vmatpush1.msra.mxu0 %v38
  %1125 = vmatprep.subr.mxu0 0.0
  %1126 = vmatpush1.msra.mxu0 %v37
  %1127 = vmatprep.subr.mxu0 0.0
  %1128 = vmatpush2.msra.mxu0 0.0
  %1129 = vmatprep.subr.mxu0 0.0
  %1130 = vmatpush2.msra.mxu0 0.0
  %1131 = vmatprep.subr.mxu0 0.0
  %1132 = vmatpush2.msra.mxu0 0.0
  %1133 = vmatprep.subr.mxu0 0.0
  %1134 = vmatpush2.msra.mxu0 0.0
  %1135 = vmatprep.subr.mxu0 0.0
  %1136 = vmatpush2.msra.mxu0 0.0
  %1137 = vmatprep.subr.mxu0 0.0
  %1138 = vmatpush2.msra.mxu0 0.0
  %1139 = vmatprep.subr.mxu0 0.0
  %1140 = vmatpush2.msra.mxu0 0.0
  %1141 = vmatprep.subr.mxu0 0.0
  %1142 = vmatpush2.msra.mxu0 0.0
  %1143 = vmatprep.subr.mxu0 0.0
  %1144 = vmatpush2.msra.mxu0 0.0
  %1145 = vmatprep.subr.mxu0 0.0
  %1146 = vmatpush2.msra.mxu0 0.0
  %1147 = vmatprep.subr.mxu0 0.0
  %1148 = vmatpush2.msra.mxu0 0.0
  %1149 = vmatprep.subr.mxu0 0.0
  %1150 = vmatpush2.msra.mxu0 0.0
  %1151 = vmatprep.subr.mxu0 0.0
  %1152 = vmatpush2.msra.mxu0 0.0
  %1153 = vmatprep.subr.mxu0 0.0
  %1154 = vmatpush2.msra.mxu0 0.0
  %1155 = vmatprep.subr.mxu0 0.0
  %1156 = vmatpush2.msra.mxu0 0.0
  %1157 = vmatprep.subr.mxu0 0.0
  %1158 = vmatpush2.msra.mxu0 0.0
  %1159 = vmatprep.mubr.f32.mxu0 0.0
  %1160 = vmatmul.mubr.f32.gmra.mxu0 %v1094
  %v1161 = vpop.f32.mrf.mxu0
  %v1162 = vadd.f32 0.0, %v1161
  %v1163 = vpop.f32.mrf.mxu0
  %1164 = vdwg.mxu0
  %v1165 = vlaneseq
  %v1166 = vshrl.u32 %v1165, 7
  %v1167 = vsub.s32 0, %v1166
  %v1168 = vrot.slane %v1162, %v1167
  %v1169 = vsub.f32 %v1072, %v1168
  %v1170 = vsub.f32 %v1075, %v1168
  %v1171 = vsub.f32 %v1080, %v1168
  %v1172 = vsub.f32 %v1083, %v1168
  %v1173 = vmul.f32 %v1169, %v1169
  %v1174 = vmul.f32 %v1170, %v1170
  %v1175 = vmul.f32 %v1171, %v1171
  %v1176 = vmul.f32 %v1172, %v1172
  %v1177 = vadd.f32 %v1173, %v1174
  %v1178 = vadd.f32 %v1177, %v1175
  %v1179 = vadd.f32 %v1178, %v1176
  %v1180 = vrot.slane %v1179, 4
  %v1181 = vadd.f32 %v1179, %v1180
  %v1182 = vrot.slane %v1181, 2
  %v1183 = vadd.f32 %v1181, %v1182
  %v1184 = vrot.slane %v1183, 1
  %v1185 = vadd.f32 %v1183, %v1184
  %1186 = vmatprep.subr.mxu0 0.0
  %1187 = vmatpush1.msra.mxu0 %v52
  %1188 = vmatprep.subr.mxu0 0.0
  %1189 = vmatpush1.msra.mxu0 %v51
  %1190 = vmatprep.subr.mxu0 0.0
  %1191 = vmatpush1.msra.mxu0 %v50
  %1192 = vmatprep.subr.mxu0 0.0
  %1193 = vmatpush1.msra.mxu0 %v49
  %1194 = vmatprep.subr.mxu0 0.0
  %1195 = vmatpush1.msra.mxu0 %v48
  %1196 = vmatprep.subr.mxu0 0.0
  %1197 = vmatpush1.msra.mxu0 %v47
  %1198 = vmatprep.subr.mxu0 0.0
  %1199 = vmatpush1.msra.mxu0 %v46
  %1200 = vmatprep.subr.mxu0 0.0
  %1201 = vmatpush1.msra.mxu0 %v45
  %1202 = vmatprep.subr.mxu0 0.0
  %1203 = vmatpush1.msra.mxu0 %v44
  %1204 = vmatprep.subr.mxu0 0.0
  %1205 = vmatpush1.msra.mxu0 %v43
  %1206 = vmatprep.subr.mxu0 0.0
  %1207 = vmatpush1.msra.mxu0 %v42
  %1208 = vmatprep.subr.mxu0 0.0
  %1209 = vmatpush1.msra.mxu0 %v41
  %1210 = vmatprep.subr.mxu0 0.0
  %1211 = vmatpush1.msra.mxu0 %v40
  %1212 = vmatprep.subr.mxu0 0.0
  %1213 = vmatpush1.msra.mxu0 %v39
  %1214 = vmatprep.subr.mxu0 0.0
  %1215 = vmatpush1.msra.mxu0 %v38
  %1216 = vmatprep.subr.mxu0 0.0
  %1217 = vmatpush1.msra.mxu0 %v37
  %1218 = vmatprep.subr.mxu0 0.0
  %1219 = vmatpush2.msra.mxu0 0.0
  %1220 = vmatprep.subr.mxu0 0.0
  %1221 = vmatpush2.msra.mxu0 0.0
  %1222 = vmatprep.subr.mxu0 0.0
  %1223 = vmatpush2.msra.mxu0 0.0
  %1224 = vmatprep.subr.mxu0 0.0
  %1225 = vmatpush2.msra.mxu0 0.0
  %1226 = vmatprep.subr.mxu0 0.0
  %1227 = vmatpush2.msra.mxu0 0.0
  %1228 = vmatprep.subr.mxu0 0.0
  %1229 = vmatpush2.msra.mxu0 0.0
  %1230 = vmatprep.subr.mxu0 0.0
  %1231 = vmatpush2.msra.mxu0 0.0
  %1232 = vmatprep.subr.mxu0 0.0
  %1233 = vmatpush2.msra.mxu0 0.0
  %1234 = vmatprep.subr.mxu0 0.0
  %1235 = vmatpush2.msra.mxu0 0.0
  %1236 = vmatprep.subr.mxu0 0.0
  %1237 = vmatpush2.msra.mxu0 0.0
  %1238 = vmatprep.subr.mxu0 0.0
  %1239 = vmatpush2.msra.mxu0 0.0
  %1240 = vmatprep.subr.mxu0 0.0
  %1241 = vmatpush2.msra.mxu0 0.0
  %1242 = vmatprep.subr.mxu0 0.0
  %1243 = vmatpush2.msra.mxu0 0.0
  %1244 = vmatprep.subr.mxu0 0.0
  %1245 = vmatpush2.msra.mxu0 0.0
  %1246 = vmatprep.subr.mxu0 0.0
  %1247 = vmatpush2.msra.mxu0 0.0
  %1248 = vmatprep.subr.mxu0 0.0
  %1249 = vmatpush2.msra.mxu0 0.0
  %1250 = vmatprep.mubr.f32.mxu0 0.0
  %1251 = vmatmul.mubr.f32.gmra.mxu0 %v1185
  %v1252 = vpop.f32.mrf.mxu0
  %v1253 = vadd.f32 1e-05, %v1252
  %v1254 = vpop.f32.mrf.mxu0
  %1255 = vdwg.mxu0
  %v1256 = vrsqrt.pop %v1253
  %v1257 = vld [vmem:[%s5] sm:$0x1]
  %v1258 = vmul.f32 %v1257, %v1256
  %v1260 = vlaneseq
  %v1261 = vshrl.u32 %v1260, 7
  %v1262 = vsub.s32 0, %v1261
  %v1263 = vrot.slane %v1258, %v1262
  %v1265 = vmul.f32 %v1169, %v1263
  %v1266 = vmul.f32 %v1170, %v1263
  %v1267 = vmul.f32 %v1171, %v1263
  %v1268 = vmul.f32 %v1172, %v1263
  %v1269 = vld [vmem:[%s6] sm:$0x1]
  %v1271 = vlaneseq
  %v1272 = vshrl.u32 %v1271, 7
  %v1273 = vsub.s32 0, %v1272
  %v1274 = vrot.slane %v1269, %v1273
  %v1276 = vadd.f32 %v1265, %v1274
  %v1277 = vadd.f32 %v1266, %v1274
  %v1278 = vadd.f32 %v1267, %v1274
  %v1279 = vadd.f32 %v1268, %v1274
  %v1280 = vadd.f32 %v1276, %v33
  %v1281 = vadd.f32 %v1277, %v34
  %v1282 = vadd.f32 %v1278, %v35
  %v1283 = vadd.f32 %v1279, %v36
  %v1284 = vmax.f32 %v1280, 0.0
  %v1285 = vmax.f32 %v1281, 0.0
  %v1286 = vmax.f32 %v1282, 0.0
  %v1287 = vmax.f32 %v1283, 0.0
  %1288 = vst [vmem:[%s9] sm:$0xff] %v1284
  %1289 = vst [vmem:[%s9 + $0x8] sm:$0xff] %v1285
  %1290 = vst [vmem:[%s9 + $0x10] sm:$0xff] %v1286
  %1291 = vst [vmem:[%s9 + $0x18] sm:$0xff] %v1287
  // Predicated region
  $region38: #{basic_block_forward.1} parent=0 // pred_check
    _
  $region39: #{basic_block_forward.1} parent=0 // pred_check_branch
    %1293 = sbr.rel (0) target = $region41
  $region40: #{basic_block_forward.1} parent=0 // pred_region
    _
  $region41: #{basic_block_forward.1} parent=0 // pred_fallthru
    _
  // Predicated region
  $region42: #{basic_block_forward.1} parent=0 // pred_check
    _
  $region43: #{basic_block_forward.1} parent=0 // pred_check_branch
    %1295 = sbr.rel (0) target = $region45
  $region44: #{basic_block_forward.1} parent=0 // pred_region
    _
  $region45: #{basic_block_forward.1} parent=0 // pred_fallthru
    _

</llo_original>
